<compile_context>
chip_gen: v6e
topology: v6e:2x2x1
jax: 0.10.0
libtpu: 0.0.40
codegen_flags: <defaults>
</compile_context>

<pallas_src>
import jax
import jax.numpy as jnp
from jax import lax
from jax.experimental import pallas as pl
from jax.experimental.pallas import tpu as pltpu


def _leaky_relu(x, slope=0.01):
    return jnp.where(x >= 0, x, slope * x)


def _sigmoid_via_tanh(x):
    # sigmoid(x) == 0.5 * tanh(0.5 * x) + 0.5 : a single EUP push on the
    # serial recurrence critical path (vs exp + reciprocal).
    return 0.5 * jnp.tanh(0.5 * x) + 0.5


def lstm_kernel(
    x_ref,                 # (T, B, C)   time-major input
    w1_ref, b1_ref,        # (C, F1), (1, F1)
    w2_ref, b2_ref,        # (F1, F2), (1, F2)
    wih_ref,               # (F2, 4H)    fused x-side gate weights (i|f|g|o)
    whh_ref,               # (H, 4H)     fused h-side gate weights (i|f|g|o)
    bg_ref,                # (1, 4H)     folded b_ih + b_hh
    wox_ref,               # (F2, NC)    wi2ox @ wfc   (i2o -> fc_final folded)
    woh_ref,               # (H, NC)     wi2oh @ wfc
    bo_ref,                # (1, NC)     bi2o @ wfc + bfc
    out_ref,               # (B, NC)
):
    T, B, C = x_ref.shape
    H = whh_ref.shape[0]
    H4 = whh_ref.shape[1]

    # ---- phase 1: all x-only matmuls, hoisted out of the recurrence -------
    x_all = x_ref[...].reshape(T * B, C)
    f1 = _leaky_relu(
        jnp.dot(x_all, w1_ref[...], preferred_element_type=jnp.float32)
        + b1_ref[...])
    f2 = _leaky_relu(
        jnp.dot(f1, w2_ref[...], preferred_element_type=jnp.float32)
        + b2_ref[...])                                   # (T*B, F2)

    # one fused gate matmul for all timesteps, bias folded once, time-major
    gx = (jnp.dot(f2, wih_ref[...], preferred_element_type=jnp.float32)
          + bg_ref[...]).reshape(T, B, H4)               # (T, B, 4H)

    whh = whh_ref[...]

    # lane-index mask for the g (cell-candidate) segment; hoisted so the
    # iota/broadcast is emitted once, not re-emitted per unrolled step.
    lane = lax.broadcasted_iota(jnp.int32, (B, H4), dimension=1)
    g_mask = (lane >= 2 * H) & (lane < 3 * H)

    # ---- phase 2: serial recurrence (one MXU dot + 3 EUP pushes / step) ---
    h = jnp.zeros((B, H), jnp.float32)
    c = jnp.zeros((B, H), jnp.float32)
    h_pre = h                       # pre-update hidden of the last step
    for t in range(T):              # static unroll: T is small & trace-time known
        h_pre = h
        gates = gx[t] + jnp.dot(h, whh, preferred_element_type=jnp.float32)
        sig = _sigmoid_via_tanh(gates)     # sigmoid over all 4H lanes
        tnh = jnp.tanh(gates)              # tanh over all 4H lanes
        act = jnp.where(g_mask, tnh, sig)  # i/f/o: sigmoid, g: tanh
        i_g = act[:, 0 * H:1 * H]
        f_g = act[:, 1 * H:2 * H]
        g_g = act[:, 2 * H:3 * H]
        o_g = act[:, 3 * H:4 * H]
        c = f_g * c + i_g * g_g
        h = o_g * jnp.tanh(c)

    # ---- epilogue: folded i2o -> fc_final, uses PRE-update last hidden ----
    f2_last = f2.reshape(T, B, -1)[T - 1]                # (B, F2)
    out_ref[...] = (
        jnp.dot(f2_last, wox_ref[...], preferred_element_type=jnp.float32)
        + jnp.dot(h_pre, woh_ref[...], preferred_element_type=jnp.float32)
        + bo_ref[...]
    )


@jax.jit
def lstm_forward(x, params):
    """x: (B, T, C_in) float32. Returns (B, num_classes)."""
    B, T, C = x.shape
    (w1, b1, w2, b2, wih, bih, whh, bhh, wi2ox, wi2oh, bi2o, wfc, bfc) = params
    NC = wfc.shape[1]

    # Fold biases and the i2o -> fc_final chain once in the wrapper (no
    # nonlinearity between them), keep gate weights fused (i|f|g|o order).
    bg = bih + bhh                          # (1, 4H)
    wox = wi2ox @ wfc                       # (F2, NC)
    woh = wi2oh @ wfc                       # (H, NC)
    bo = bi2o @ wfc + bfc                   # (1, NC)

    x_tm = jnp.transpose(x, (1, 0, 2))      # time-major (T, B, C)

    inputs = (x_tm, w1, b1, w2, b2, wih, whh, bg, wox, woh, bo)

    def full_spec(a):
        nd = a.ndim
        return pl.BlockSpec(a.shape, lambda i, _nd=nd: (0,) * _nd)

    grid_spec = pltpu.PrefetchScalarGridSpec(
        num_scalar_prefetch=0,
        grid=(1,),                          # single invocation; T loop in-kernel
        in_specs=[full_spec(a) for a in inputs],
        out_specs=pl.BlockSpec((B, NC), lambda i: (0, 0)),
    )

    return pl.pallas_call(
        lstm_kernel,
        out_shape=jax.ShapeDtypeStruct((B, NC), jnp.float32),
        grid_spec=grid_spec,
        compiler_params=pltpu.CompilerParams(
            dimension_semantics=("arbitrary",),
        ),
    )(*inputs)


def init_params(key, in_channels=5, num_classes=1, fc_sizes=(64, 128), hidden=20):
    """Deterministic PyTorch-style init. All linear weights stored as (in, out)."""
    F1, F2 = fc_sizes
    ks = jax.random.split(key, 13)

    def lin(k, fan_in, fan_out):
        kw, kb = jax.random.split(k)
        bound = 1.0 / jnp.sqrt(fan_in)
        w = jax.random.uniform(kw, (fan_in, fan_out), jnp.float32, -bound, bound)
        b = jax.random.uniform(kb, (1, fan_out), jnp.float32, -bound, bound)
        return w, b

    w1, b1 = lin(ks[0], in_channels, F1)
    w2, b2 = lin(ks[1], F1, F2)

    # LSTMCell params (PyTorch stores (4H, in); we store transposed (in, 4H)),
    # gate order (i, f, g, o).
    bound = 1.0 / jnp.sqrt(hidden)
    wih = jax.random.uniform(ks[2], (F2, 4 * hidden), jnp.float32, -bound, bound)
    bih = jax.random.uniform(ks[3], (1, 4 * hidden), jnp.float32, -bound, bound)
    whh = jax.random.uniform(ks[4], (hidden, 4 * hidden), jnp.float32, -bound, bound)
    bhh = jax.random.uniform(ks[5], (1, 4 * hidden), jnp.float32, -bound, bound)

    # i2o: Linear(F2 + H -> H), split into x-part and h-part
    wi2o, bi2o = lin(ks[6], F2 + hidden, hidden)
    wi2ox = wi2o[:F2, :]
    wi2oh = wi2o[F2:, :]

    wfc, bfc = lin(ks[7], hidden, num_classes)

    return (w1, b1, w2, b2, wih, bih, whh, bhh, wi2ox, wi2oh, bi2o, wfc, bfc)


def reference_forward(x, params):
    """Pure-JAX reference matching the PyTorch module (eval mode, dropout = identity)."""
    (w1, b1, w2, b2, wih, bih, whh, bhh, wi2ox, wi2oh, bi2o, wfc, bfc) = params
    B, T, _ = x.shape
    H = whh.shape[0]
    h = jnp.zeros((B, H), jnp.float32)
    c = jnp.zeros((B, H), jnp.float32)
    out = None
    for t in range(T):
        xt = x[:, t]
        f1 = _leaky_relu(xt @ w1 + b1)
        f2 = _leaky_relu(f1 @ w2 + b2)
        gates = f2 @ wih + bih + h @ whh + bhh
        i_g = jax.nn.sigmoid(gates[:, 0 * H:1 * H])
        f_g = jax.nn.sigmoid(gates[:, 1 * H:2 * H])
        g_g = jnp.tanh(gates[:, 2 * H:3 * H])
        o_g = jax.nn.sigmoid(gates[:, 3 * H:4 * H])
        out = f2 @ wi2ox + h @ wi2oh + bi2o  # uses pre-update hidden
        c = f_g * c + i_g * g_g
        h = o_g * jnp.tanh(c)
    return out @ wfc + bfc


if __name__ == "__main__":
    key = jax.random.PRNGKey(0)
    kx, kp = jax.random.split(key)

    B, T, C_IN = 2, 8, 5
    x = jax.random.normal(kx, (B, T, C_IN), jnp.float32)
    params = init_params(kp, in_channels=C_IN, num_classes=1,
                         fc_sizes=(64, 128), hidden=20)

    out = jax.block_until_ready(lstm_forward(x, params))
    ref = jax.block_until_ready(reference_forward(x, params))

    assert out.shape == (B, 1), out.shape
    assert jnp.allclose(out, ref, atol=1e-4, rtol=1e-4), (out, ref)
    print("KERNEL_OK")
</pallas_src>

<mosaic_0001>
module attributes {stable_mosaic.version = 11 : i64} {
  func.func @lstm_kernel(%arg0: i32, %arg1: memref<8x2x5xf32, #tpu.memory_space<vmem>>, %arg2: memref<5x64xf32, #tpu.memory_space<vmem>>, %arg3: memref<1x64xf32, #tpu.memory_space<vmem>>, %arg4: memref<64x128xf32, #tpu.memory_space<vmem>>, %arg5: memref<1x128xf32, #tpu.memory_space<vmem>>, %arg6: memref<128x80xf32, #tpu.memory_space<vmem>>, %arg7: memref<20x80xf32, #tpu.memory_space<vmem>>, %arg8: memref<1x80xf32, #tpu.memory_space<vmem>>, %arg9: memref<128x1xf32, #tpu.memory_space<vmem>>, %arg10: memref<20x1xf32, #tpu.memory_space<vmem>>, %arg11: memref<1x1xf32, #tpu.memory_space<vmem>>, %arg12: memref<2x1xf32, #tpu.memory_space<vmem>>) attributes {dimension_semantics = [#tpu.dimension_semantics<arbitrary>], iteration_bounds = array<i64: 1>, scalar_prefetch = 0 : i64, scratch_operands = 0 : i64, tpu.core_type = #tpu.core_type<tc>, window_params = [{pipeline_mode = #tpu.pipeline_mode<synchronous>, transform_indices = @transform_0, window_bounds = array<i64: 8, 2, 5>}, {pipeline_mode = #tpu.pipeline_mode<synchronous>, transform_indices = @transform_1, window_bounds = array<i64: 5, 64>}, {pipeline_mode = #tpu.pipeline_mode<synchronous>, transform_indices = @transform_2, window_bounds = array<i64: 1, 64>}, {pipeline_mode = #tpu.pipeline_mode<synchronous>, transform_indices = @transform_3, window_bounds = array<i64: 64, 128>}, {pipeline_mode = #tpu.pipeline_mode<synchronous>, transform_indices = @transform_4, window_bounds = array<i64: 1, 128>}, {pipeline_mode = #tpu.pipeline_mode<synchronous>, transform_indices = @transform_5, window_bounds = array<i64: 128, 80>}, {pipeline_mode = #tpu.pipeline_mode<synchronous>, transform_indices = @transform_6, window_bounds = array<i64: 20, 80>}, {pipeline_mode = #tpu.pipeline_mode<synchronous>, transform_indices = @transform_7, window_bounds = array<i64: 1, 80>}, {pipeline_mode = #tpu.pipeline_mode<synchronous>, transform_indices = @transform_8, window_bounds = array<i64: 128, 1>}, {pipeline_mode = #tpu.pipeline_mode<synchronous>, transform_indices = @transform_9, window_bounds = array<i64: 20, 1>}, {pipeline_mode = #tpu.pipeline_mode<synchronous>, transform_indices = @transform_10, window_bounds = array<i64: 1, 1>}, {pipeline_mode = #tpu.pipeline_mode<synchronous>, transform_indices = @transform_11, window_bounds = array<i64: 2, 1>}]} {
    %c0 = arith.constant 0 : index
    %c0_0 = arith.constant 0 : index
    %c0_1 = arith.constant 0 : index
    %0 = vector.load %arg1[%c0, %c0_0, %c0_1] : memref<8x2x5xf32, #tpu.memory_space<vmem>>, vector<8x2x5xf32>
    %1 = vector.shape_cast %0 : vector<8x2x5xf32> to vector<16x5xf32>
    %c0_2 = arith.constant 0 : index
    %c0_3 = arith.constant 0 : index
    %2 = vector.load %arg2[%c0_2, %c0_3] : memref<5x64xf32, #tpu.memory_space<vmem>>, vector<5x64xf32>
    %cst = arith.constant dense<0.000000e+00> : vector<16x64xf32>
    %3 = tpu.matmul %1, %2, %cst {dimension_numbers = #tpu.dot_dimension_numbers<[1], [0], [0], [1], [0, 0, 1, 1], [], []>} : vector<16x5xf32>, vector<5x64xf32>, vector<16x64xf32> -> vector<16x64xf32>
    %c0_4 = arith.constant 0 : index
    %c0_5 = arith.constant 0 : index
    %4 = vector.load %arg3[%c0_4, %c0_5] : memref<1x64xf32, #tpu.memory_space<vmem>>, vector<1x64xf32>
    %5 = vector.broadcast %4 : vector<1x64xf32> to vector<16x64xf32>
    %6 = arith.addf %3, %5 : vector<16x64xf32>
    %cst_6 = arith.constant 0.000000e+00 : f32
    %7 = vector.broadcast %cst_6 : f32 to vector<16x64xf32>
    %8 = arith.cmpf oge, %6, %7 : vector<16x64xf32>
    %cst_7 = arith.constant 0.00999999977 : f32
    %9 = vector.broadcast %cst_7 : f32 to vector<16x64xf32>
    %10 = arith.mulf %9, %6 : vector<16x64xf32>
    %11 = arith.select %8, %6, %10 : vector<16x64xi1>, vector<16x64xf32>
    %c0_8 = arith.constant 0 : index
    %c0_9 = arith.constant 0 : index
    %12 = vector.load %arg4[%c0_8, %c0_9] : memref<64x128xf32, #tpu.memory_space<vmem>>, vector<64x128xf32>
    %cst_10 = arith.constant dense<0.000000e+00> : vector<16x128xf32>
    %13 = tpu.matmul %11, %12, %cst_10 {dimension_numbers = #tpu.dot_dimension_numbers<[1], [0], [0], [1], [0, 0, 1, 1], [], []>} : vector<16x64xf32>, vector<64x128xf32>, vector<16x128xf32> -> vector<16x128xf32>
    %c0_11 = arith.constant 0 : index
    %c0_12 = arith.constant 0 : index
    %14 = vector.load %arg5[%c0_11, %c0_12] : memref<1x128xf32, #tpu.memory_space<vmem>>, vector<1x128xf32>
    %15 = vector.broadcast %14 : vector<1x128xf32> to vector<16x128xf32>
    %16 = arith.addf %13, %15 : vector<16x128xf32>
    %cst_13 = arith.constant 0.000000e+00 : f32
    %17 = vector.broadcast %cst_13 : f32 to vector<16x128xf32>
    %18 = arith.cmpf oge, %16, %17 : vector<16x128xf32>
    %cst_14 = arith.constant 0.00999999977 : f32
    %19 = vector.broadcast %cst_14 : f32 to vector<16x128xf32>
    %20 = arith.mulf %19, %16 : vector<16x128xf32>
    %21 = arith.select %18, %16, %20 : vector<16x128xi1>, vector<16x128xf32>
    %c0_15 = arith.constant 0 : index
    %c0_16 = arith.constant 0 : index
    %22 = vector.load %arg6[%c0_15, %c0_16] : memref<128x80xf32, #tpu.memory_space<vmem>>, vector<128x80xf32>
    %cst_17 = arith.constant dense<0.000000e+00> : vector<16x80xf32>
    %23 = tpu.matmul %21, %22, %cst_17 {dimension_numbers = #tpu.dot_dimension_numbers<[1], [0], [0], [1], [0, 0, 1, 1], [], []>} : vector<16x128xf32>, vector<128x80xf32>, vector<16x80xf32> -> vector<16x80xf32>
    %c0_18 = arith.constant 0 : index
    %c0_19 = arith.constant 0 : index
    %24 = vector.load %arg8[%c0_18, %c0_19] : memref<1x80xf32, #tpu.memory_space<vmem>>, vector<1x80xf32>
    %25 = vector.broadcast %24 : vector<1x80xf32> to vector<16x80xf32>
    %26 = arith.addf %23, %25 : vector<16x80xf32>
    %27 = vector.shape_cast %26 : vector<16x80xf32> to vector<8x2x80xf32>
    %c0_20 = arith.constant 0 : index
    %c0_21 = arith.constant 0 : index
    %28 = vector.load %arg7[%c0_20, %c0_21] : memref<20x80xf32, #tpu.memory_space<vmem>>, vector<20x80xf32>
    %29 = tpu.iota {dimensions = array<i32: 1>} : vector<2x80xi32>
    %c40_i32 = arith.constant 40 : i32
    %30 = vector.broadcast %c40_i32 : i32 to vector<2x80xi32>
    %31 = arith.cmpi sge, %29, %30 : vector<2x80xi32>
    %c60_i32 = arith.constant 60 : i32
    %32 = vector.broadcast %c60_i32 : i32 to vector<2x80xi32>
    %33 = arith.cmpi slt, %29, %32 : vector<2x80xi32>
    %34 = arith.andi %31, %33 : vector<2x80xi1>
    %cst_22 = arith.constant 0.000000e+00 : f32
    %35 = vector.broadcast %cst_22 : f32 to vector<2x20xf32>
    %cst_23 = arith.constant 0.000000e+00 : f32
    %36 = vector.broadcast %cst_23 : f32 to vector<2x20xf32>
    %37 = vector.extract_strided_slice %27 {offsets = [0, 0, 0], sizes = [1, 2, 80], strides = [1, 1, 1]} : vector<8x2x80xf32> to vector<1x2x80xf32>
    %38 = vector.shape_cast %37 : vector<1x2x80xf32> to vector<2x80xf32>
    %cst_24 = arith.constant dense<0.000000e+00> : vector<2x80xf32>
    %39 = tpu.matmul %35, %28, %cst_24 {dimension_numbers = #tpu.dot_dimension_numbers<[1], [0], [0], [1], [0, 0, 1, 1], [], []>} : vector<2x20xf32>, vector<20x80xf32>, vector<2x80xf32> -> vector<2x80xf32>
    %40 = arith.addf %38, %39 : vector<2x80xf32>
    %cst_25 = arith.constant 5.000000e-01 : f32
    %41 = vector.broadcast %cst_25 : f32 to vector<2x80xf32>
    %42 = arith.mulf %41, %40 : vector<2x80xf32>
    %43 = math.tanh %42 : vector<2x80xf32>
    %cst_26 = arith.constant 5.000000e-01 : f32
    %44 = vector.broadcast %cst_26 : f32 to vector<2x80xf32>
    %45 = arith.mulf %44, %43 : vector<2x80xf32>
    %cst_27 = arith.constant 5.000000e-01 : f32
    %46 = vector.broadcast %cst_27 : f32 to vector<2x80xf32>
    %47 = arith.addf %45, %46 : vector<2x80xf32>
    %48 = math.tanh %40 : vector<2x80xf32>
    %49 = arith.select %34, %48, %47 : vector<2x80xi1>, vector<2x80xf32>
    %50 = vector.extract_strided_slice %49 {offsets = [0, 0], sizes = [2, 20], strides = [1, 1]} : vector<2x80xf32> to vector<2x20xf32>
    %51 = vector.extract_strided_slice %49 {offsets = [0, 20], sizes = [2, 20], strides = [1, 1]} : vector<2x80xf32> to vector<2x20xf32>
    %52 = vector.extract_strided_slice %49 {offsets = [0, 40], sizes = [2, 20], strides = [1, 1]} : vector<2x80xf32> to vector<2x20xf32>
    %53 = vector.extract_strided_slice %49 {offsets = [0, 60], sizes = [2, 20], strides = [1, 1]} : vector<2x80xf32> to vector<2x20xf32>
    %54 = arith.mulf %51, %36 : vector<2x20xf32>
    %55 = arith.mulf %50, %52 : vector<2x20xf32>
    %56 = arith.addf %54, %55 : vector<2x20xf32>
    %57 = math.tanh %56 : vector<2x20xf32>
    %58 = arith.mulf %53, %57 : vector<2x20xf32>
    %59 = vector.extract_strided_slice %27 {offsets = [1, 0, 0], sizes = [1, 2, 80], strides = [1, 1, 1]} : vector<8x2x80xf32> to vector<1x2x80xf32>
    %60 = vector.shape_cast %59 : vector<1x2x80xf32> to vector<2x80xf32>
    %cst_28 = arith.constant dense<0.000000e+00> : vector<2x80xf32>
    %61 = tpu.matmul %58, %28, %cst_28 {dimension_numbers = #tpu.dot_dimension_numbers<[1], [0], [0], [1], [0, 0, 1, 1], [], []>} : vector<2x20xf32>, vector<20x80xf32>, vector<2x80xf32> -> vector<2x80xf32>
    %62 = arith.addf %60, %61 : vector<2x80xf32>
    %cst_29 = arith.constant 5.000000e-01 : f32
    %63 = vector.broadcast %cst_29 : f32 to vector<2x80xf32>
    %64 = arith.mulf %63, %62 : vector<2x80xf32>
    %65 = math.tanh %64 : vector<2x80xf32>
    %cst_30 = arith.constant 5.000000e-01 : f32
    %66 = vector.broadcast %cst_30 : f32 to vector<2x80xf32>
    %67 = arith.mulf %66, %65 : vector<2x80xf32>
    %cst_31 = arith.constant 5.000000e-01 : f32
    %68 = vector.broadcast %cst_31 : f32 to vector<2x80xf32>
    %69 = arith.addf %67, %68 : vector<2x80xf32>
    %70 = math.tanh %62 : vector<2x80xf32>
    %71 = arith.select %34, %70, %69 : vector<2x80xi1>, vector<2x80xf32>
    %72 = vector.extract_strided_slice %71 {offsets = [0, 0], sizes = [2, 20], strides = [1, 1]} : vector<2x80xf32> to vector<2x20xf32>
    %73 = vector.extract_strided_slice %71 {offsets = [0, 20], sizes = [2, 20], strides = [1, 1]} : vector<2x80xf32> to vector<2x20xf32>
    %74 = vector.extract_strided_slice %71 {offsets = [0, 40], sizes = [2, 20], strides = [1, 1]} : vector<2x80xf32> to vector<2x20xf32>
    %75 = vector.extract_strided_slice %71 {offsets = [0, 60], sizes = [2, 20], strides = [1, 1]} : vector<2x80xf32> to vector<2x20xf32>
    %76 = arith.mulf %73, %56 : vector<2x20xf32>
    %77 = arith.mulf %72, %74 : vector<2x20xf32>
    %78 = arith.addf %76, %77 : vector<2x20xf32>
    %79 = math.tanh %78 : vector<2x20xf32>
    %80 = arith.mulf %75, %79 : vector<2x20xf32>
    %81 = vector.extract_strided_slice %27 {offsets = [2, 0, 0], sizes = [1, 2, 80], strides = [1, 1, 1]} : vector<8x2x80xf32> to vector<1x2x80xf32>
    %82 = vector.shape_cast %81 : vector<1x2x80xf32> to vector<2x80xf32>
    %cst_32 = arith.constant dense<0.000000e+00> : vector<2x80xf32>
    %83 = tpu.matmul %80, %28, %cst_32 {dimension_numbers = #tpu.dot_dimension_numbers<[1], [0], [0], [1], [0, 0, 1, 1], [], []>} : vector<2x20xf32>, vector<20x80xf32>, vector<2x80xf32> -> vector<2x80xf32>
    %84 = arith.addf %82, %83 : vector<2x80xf32>
    %cst_33 = arith.constant 5.000000e-01 : f32
    %85 = vector.broadcast %cst_33 : f32 to vector<2x80xf32>
    %86 = arith.mulf %85, %84 : vector<2x80xf32>
    %87 = math.tanh %86 : vector<2x80xf32>
    %cst_34 = arith.constant 5.000000e-01 : f32
    %88 = vector.broadcast %cst_34 : f32 to vector<2x80xf32>
    %89 = arith.mulf %88, %87 : vector<2x80xf32>
    %cst_35 = arith.constant 5.000000e-01 : f32
    %90 = vector.broadcast %cst_35 : f32 to vector<2x80xf32>
    %91 = arith.addf %89, %90 : vector<2x80xf32>
    %92 = math.tanh %84 : vector<2x80xf32>
    %93 = arith.select %34, %92, %91 : vector<2x80xi1>, vector<2x80xf32>
    %94 = vector.extract_strided_slice %93 {offsets = [0, 0], sizes = [2, 20], strides = [1, 1]} : vector<2x80xf32> to vector<2x20xf32>
    %95 = vector.extract_strided_slice %93 {offsets = [0, 20], sizes = [2, 20], strides = [1, 1]} : vector<2x80xf32> to vector<2x20xf32>
    %96 = vector.extract_strided_slice %93 {offsets = [0, 40], sizes = [2, 20], strides = [1, 1]} : vector<2x80xf32> to vector<2x20xf32>
    %97 = vector.extract_strided_slice %93 {offsets = [0, 60], sizes = [2, 20], strides = [1, 1]} : vector<2x80xf32> to vector<2x20xf32>
    %98 = arith.mulf %95, %78 : vector<2x20xf32>
    %99 = arith.mulf %94, %96 : vector<2x20xf32>
    %100 = arith.addf %98, %99 : vector<2x20xf32>
    %101 = math.tanh %100 : vector<2x20xf32>
    %102 = arith.mulf %97, %101 : vector<2x20xf32>
    %103 = vector.extract_strided_slice %27 {offsets = [3, 0, 0], sizes = [1, 2, 80], strides = [1, 1, 1]} : vector<8x2x80xf32> to vector<1x2x80xf32>
    %104 = vector.shape_cast %103 : vector<1x2x80xf32> to vector<2x80xf32>
    %cst_36 = arith.constant dense<0.000000e+00> : vector<2x80xf32>
    %105 = tpu.matmul %102, %28, %cst_36 {dimension_numbers = #tpu.dot_dimension_numbers<[1], [0], [0], [1], [0, 0, 1, 1], [], []>} : vector<2x20xf32>, vector<20x80xf32>, vector<2x80xf32> -> vector<2x80xf32>
    %106 = arith.addf %104, %105 : vector<2x80xf32>
    %cst_37 = arith.constant 5.000000e-01 : f32
    %107 = vector.broadcast %cst_37 : f32 to vector<2x80xf32>
    %108 = arith.mulf %107, %106 : vector<2x80xf32>
    %109 = math.tanh %108 : vector<2x80xf32>
    %cst_38 = arith.constant 5.000000e-01 : f32
    %110 = vector.broadcast %cst_38 : f32 to vector<2x80xf32>
    %111 = arith.mulf %110, %109 : vector<2x80xf32>
    %cst_39 = arith.constant 5.000000e-01 : f32
    %112 = vector.broadcast %cst_39 : f32 to vector<2x80xf32>
    %113 = arith.addf %111, %112 : vector<2x80xf32>
    %114 = math.tanh %106 : vector<2x80xf32>
    %115 = arith.select %34, %114, %113 : vector<2x80xi1>, vector<2x80xf32>
    %116 = vector.extract_strided_slice %115 {offsets = [0, 0], sizes = [2, 20], strides = [1, 1]} : vector<2x80xf32> to vector<2x20xf32>
    %117 = vector.extract_strided_slice %115 {offsets = [0, 20], sizes = [2, 20], strides = [1, 1]} : vector<2x80xf32> to vector<2x20xf32>
    %118 = vector.extract_strided_slice %115 {offsets = [0, 40], sizes = [2, 20], strides = [1, 1]} : vector<2x80xf32> to vector<2x20xf32>
    %119 = vector.extract_strided_slice %115 {offsets = [0, 60], sizes = [2, 20], strides = [1, 1]} : vector<2x80xf32> to vector<2x20xf32>
    %120 = arith.mulf %117, %100 : vector<2x20xf32>
    %121 = arith.mulf %116, %118 : vector<2x20xf32>
    %122 = arith.addf %120, %121 : vector<2x20xf32>
    %123 = math.tanh %122 : vector<2x20xf32>
    %124 = arith.mulf %119, %123 : vector<2x20xf32>
    %125 = vector.extract_strided_slice %27 {offsets = [4, 0, 0], sizes = [1, 2, 80], strides = [1, 1, 1]} : vector<8x2x80xf32> to vector<1x2x80xf32>
    %126 = vector.shape_cast %125 : vector<1x2x80xf32> to vector<2x80xf32>
    %cst_40 = arith.constant dense<0.000000e+00> : vector<2x80xf32>
    %127 = tpu.matmul %124, %28, %cst_40 {dimension_numbers = #tpu.dot_dimension_numbers<[1], [0], [0], [1], [0, 0, 1, 1], [], []>} : vector<2x20xf32>, vector<20x80xf32>, vector<2x80xf32> -> vector<2x80xf32>
    %128 = arith.addf %126, %127 : vector<2x80xf32>
    %cst_41 = arith.constant 5.000000e-01 : f32
    %129 = vector.broadcast %cst_41 : f32 to vector<2x80xf32>
    %130 = arith.mulf %129, %128 : vector<2x80xf32>
    %131 = math.tanh %130 : vector<2x80xf32>
    %cst_42 = arith.constant 5.000000e-01 : f32
    %132 = vector.broadcast %cst_42 : f32 to vector<2x80xf32>
    %133 = arith.mulf %132, %131 : vector<2x80xf32>
    %cst_43 = arith.constant 5.000000e-01 : f32
    %134 = vector.broadcast %cst_43 : f32 to vector<2x80xf32>
    %135 = arith.addf %133, %134 : vector<2x80xf32>
    %136 = math.tanh %128 : vector<2x80xf32>
    %137 = arith.select %34, %136, %135 : vector<2x80xi1>, vector<2x80xf32>
    %138 = vector.extract_strided_slice %137 {offsets = [0, 0], sizes = [2, 20], strides = [1, 1]} : vector<2x80xf32> to vector<2x20xf32>
    %139 = vector.extract_strided_slice %137 {offsets = [0, 20], sizes = [2, 20], strides = [1, 1]} : vector<2x80xf32> to vector<2x20xf32>
    %140 = vector.extract_strided_slice %137 {offsets = [0, 40], sizes = [2, 20], strides = [1, 1]} : vector<2x80xf32> to vector<2x20xf32>
    %141 = vector.extract_strided_slice %137 {offsets = [0, 60], sizes = [2, 20], strides = [1, 1]} : vector<2x80xf32> to vector<2x20xf32>
    %142 = arith.mulf %139, %122 : vector<2x20xf32>
    %143 = arith.mulf %138, %140 : vector<2x20xf32>
    %144 = arith.addf %142, %143 : vector<2x20xf32>
    %145 = math.tanh %144 : vector<2x20xf32>
    %146 = arith.mulf %141, %145 : vector<2x20xf32>
    %147 = vector.extract_strided_slice %27 {offsets = [5, 0, 0], sizes = [1, 2, 80], strides = [1, 1, 1]} : vector<8x2x80xf32> to vector<1x2x80xf32>
    %148 = vector.shape_cast %147 : vector<1x2x80xf32> to vector<2x80xf32>
    %cst_44 = arith.constant dense<0.000000e+00> : vector<2x80xf32>
    %149 = tpu.matmul %146, %28, %cst_44 {dimension_numbers = #tpu.dot_dimension_numbers<[1], [0], [0], [1], [0, 0, 1, 1], [], []>} : vector<2x20xf32>, vector<20x80xf32>, vector<2x80xf32> -> vector<2x80xf32>
    %150 = arith.addf %148, %149 : vector<2x80xf32>
    %cst_45 = arith.constant 5.000000e-01 : f32
    %151 = vector.broadcast %cst_45 : f32 to vector<2x80xf32>
    %152 = arith.mulf %151, %150 : vector<2x80xf32>
    %153 = math.tanh %152 : vector<2x80xf32>
    %cst_46 = arith.constant 5.000000e-01 : f32
    %154 = vector.broadcast %cst_46 : f32 to vector<2x80xf32>
    %155 = arith.mulf %154, %153 : vector<2x80xf32>
    %cst_47 = arith.constant 5.000000e-01 : f32
    %156 = vector.broadcast %cst_47 : f32 to vector<2x80xf32>
    %157 = arith.addf %155, %156 : vector<2x80xf32>
    %158 = math.tanh %150 : vector<2x80xf32>
    %159 = arith.select %34, %158, %157 : vector<2x80xi1>, vector<2x80xf32>
    %160 = vector.extract_strided_slice %159 {offsets = [0, 0], sizes = [2, 20], strides = [1, 1]} : vector<2x80xf32> to vector<2x20xf32>
    %161 = vector.extract_strided_slice %159 {offsets = [0, 20], sizes = [2, 20], strides = [1, 1]} : vector<2x80xf32> to vector<2x20xf32>
    %162 = vector.extract_strided_slice %159 {offsets = [0, 40], sizes = [2, 20], strides = [1, 1]} : vector<2x80xf32> to vector<2x20xf32>
    %163 = vector.extract_strided_slice %159 {offsets = [0, 60], sizes = [2, 20], strides = [1, 1]} : vector<2x80xf32> to vector<2x20xf32>
    %164 = arith.mulf %161, %144 : vector<2x20xf32>
    %165 = arith.mulf %160, %162 : vector<2x20xf32>
    %166 = arith.addf %164, %165 : vector<2x20xf32>
    %167 = math.tanh %166 : vector<2x20xf32>
    %168 = arith.mulf %163, %167 : vector<2x20xf32>
    %169 = vector.extract_strided_slice %27 {offsets = [6, 0, 0], sizes = [1, 2, 80], strides = [1, 1, 1]} : vector<8x2x80xf32> to vector<1x2x80xf32>
    %170 = vector.shape_cast %169 : vector<1x2x80xf32> to vector<2x80xf32>
    %cst_48 = arith.constant dense<0.000000e+00> : vector<2x80xf32>
    %171 = tpu.matmul %168, %28, %cst_48 {dimension_numbers = #tpu.dot_dimension_numbers<[1], [0], [0], [1], [0, 0, 1, 1], [], []>} : vector<2x20xf32>, vector<20x80xf32>, vector<2x80xf32> -> vector<2x80xf32>
    %172 = arith.addf %170, %171 : vector<2x80xf32>
    %cst_49 = arith.constant 5.000000e-01 : f32
    %173 = vector.broadcast %cst_49 : f32 to vector<2x80xf32>
    %174 = arith.mulf %173, %172 : vector<2x80xf32>
    %175 = math.tanh %174 : vector<2x80xf32>
    %cst_50 = arith.constant 5.000000e-01 : f32
    %176 = vector.broadcast %cst_50 : f32 to vector<2x80xf32>
    %177 = arith.mulf %176, %175 : vector<2x80xf32>
    %cst_51 = arith.constant 5.000000e-01 : f32
    %178 = vector.broadcast %cst_51 : f32 to vector<2x80xf32>
    %179 = arith.addf %177, %178 : vector<2x80xf32>
    %180 = math.tanh %172 : vector<2x80xf32>
    %181 = arith.select %34, %180, %179 : vector<2x80xi1>, vector<2x80xf32>
    %182 = vector.extract_strided_slice %181 {offsets = [0, 0], sizes = [2, 20], strides = [1, 1]} : vector<2x80xf32> to vector<2x20xf32>
    %183 = vector.extract_strided_slice %181 {offsets = [0, 20], sizes = [2, 20], strides = [1, 1]} : vector<2x80xf32> to vector<2x20xf32>
    %184 = vector.extract_strided_slice %181 {offsets = [0, 40], sizes = [2, 20], strides = [1, 1]} : vector<2x80xf32> to vector<2x20xf32>
    %185 = vector.extract_strided_slice %181 {offsets = [0, 60], sizes = [2, 20], strides = [1, 1]} : vector<2x80xf32> to vector<2x20xf32>
    %186 = arith.mulf %183, %166 : vector<2x20xf32>
    %187 = arith.mulf %182, %184 : vector<2x20xf32>
    %188 = arith.addf %186, %187 : vector<2x20xf32>
    %189 = math.tanh %188 : vector<2x20xf32>
    %190 = arith.mulf %185, %189 : vector<2x20xf32>
    %191 = vector.shape_cast %21 : vector<16x128xf32> to vector<8x2x128xf32>
    %192 = vector.extract_strided_slice %191 {offsets = [7, 0, 0], sizes = [1, 2, 128], strides = [1, 1, 1]} : vector<8x2x128xf32> to vector<1x2x128xf32>
    %193 = vector.shape_cast %192 : vector<1x2x128xf32> to vector<2x128xf32>
    %c0_52 = arith.constant 0 : index
    %c0_53 = arith.constant 0 : index
    %194 = vector.load %arg9[%c0_52, %c0_53] : memref<128x1xf32, #tpu.memory_space<vmem>>, vector<128x1xf32>
    %cst_54 = arith.constant dense<0.000000e+00> : vector<2x1xf32>
    %195 = tpu.matmul %193, %194, %cst_54 {dimension_numbers = #tpu.dot_dimension_numbers<[1], [0], [0], [1], [0, 0, 1, 1], [], []>} : vector<2x128xf32>, vector<128x1xf32>, vector<2x1xf32> -> vector<2x1xf32>
    %c0_55 = arith.constant 0 : index
    %c0_56 = arith.constant 0 : index
    %196 = vector.load %arg10[%c0_55, %c0_56] : memref<20x1xf32, #tpu.memory_space<vmem>>, vector<20x1xf32>
    %cst_57 = arith.constant dense<0.000000e+00> : vector<2x1xf32>
    %197 = tpu.matmul %190, %196, %cst_57 {dimension_numbers = #tpu.dot_dimension_numbers<[1], [0], [0], [1], [0, 0, 1, 1], [], []>} : vector<2x20xf32>, vector<20x1xf32>, vector<2x1xf32> -> vector<2x1xf32>
    %198 = arith.addf %195, %197 : vector<2x1xf32>
    %c0_58 = arith.constant 0 : index
    %c0_59 = arith.constant 0 : index
    %199 = vector.load %arg11[%c0_58, %c0_59] : memref<1x1xf32, #tpu.memory_space<vmem>>, vector<1x1xf32>
    %200 = vector.broadcast %199 : vector<1x1xf32> to vector<2x1xf32>
    %201 = arith.addf %198, %200 : vector<2x1xf32>
    %c0_60 = arith.constant 0 : index
    %c0_61 = arith.constant 0 : index
    %202 = vector.load %arg12[%c0_60, %c0_61] : memref<2x1xf32, #tpu.memory_space<vmem>>, vector<2x1xf32>
    tpu.vector_store %arg12[%c0_60, %c0_61], %201 {strides = array<i32>} : memref<2x1xf32, #tpu.memory_space<vmem>>, vector<2x1xf32>,
    return
  }
  func.func @transform_0(%arg0: i32) -> (i32, i32, i32) {
    %c0_i32 = arith.constant 0 : i32
    %c0_i32_0 = arith.constant 0 : i32
    %c0_i32_1 = arith.constant 0 : i32
    %c0_i32_2 = arith.constant 0 : i32
    return %c0_i32, %c0_i32_0, %c0_i32_1 : i32, i32, i32
  }
  func.func @transform_1(%arg0: i32) -> (i32, i32) {
    %c0_i32 = arith.constant 0 : i32
    %c0_i32_0 = arith.constant 0 : i32
    %c0_i32_1 = arith.constant 0 : i32
    return %c0_i32, %c0_i32_0 : i32, i32
  }
  func.func @transform_2(%arg0: i32) -> (i32, i32) {
    %c0_i32 = arith.constant 0 : i32
    %c0_i32_0 = arith.constant 0 : i32
    %c0_i32_1 = arith.constant 0 : i32
    return %c0_i32, %c0_i32_0 : i32, i32
  }
  func.func @transform_3(%arg0: i32) -> (i32, i32) {
    %c0_i32 = arith.constant 0 : i32
    %c0_i32_0 = arith.constant 0 : i32
    %c0_i32_1 = arith.constant 0 : i32
    return %c0_i32, %c0_i32_0 : i32, i32
  }
  func.func @transform_4(%arg0: i32) -> (i32, i32) {
    %c0_i32 = arith.constant 0 : i32
    %c0_i32_0 = arith.constant 0 : i32
    %c0_i32_1 = arith.constant 0 : i32
    return %c0_i32, %c0_i32_0 : i32, i32
  }
  func.func @transform_5(%arg0: i32) -> (i32, i32) {
    %c0_i32 = arith.constant 0 : i32
    %c0_i32_0 = arith.constant 0 : i32
    %c0_i32_1 = arith.constant 0 : i32
    return %c0_i32, %c0_i32_0 : i32, i32
  }
  func.func @transform_6(%arg0: i32) -> (i32, i32) {
    %c0_i32 = arith.constant 0 : i32
    %c0_i32_0 = arith.constant 0 : i32
    %c0_i32_1 = arith.constant 0 : i32
    return %c0_i32, %c0_i32_0 : i32, i32
  }
  func.func @transform_7(%arg0: i32) -> (i32, i32) {
    %c0_i32 = arith.constant 0 : i32
    %c0_i32_0 = arith.constant 0 : i32
    %c0_i32_1 = arith.constant 0 : i32
    return %c0_i32, %c0_i32_0 : i32, i32
  }
  func.func @transform_8(%arg0: i32) -> (i32, i32) {
    %c0_i32 = arith.constant 0 : i32
    %c0_i32_0 = arith.constant 0 : i32
    %c0_i32_1 = arith.constant 0 : i32
    return %c0_i32, %c0_i32_0 : i32, i32
  }
  func.func @transform_9(%arg0: i32) -> (i32, i32) {
    %c0_i32 = arith.constant 0 : i32
    %c0_i32_0 = arith.constant 0 : i32
    %c0_i32_1 = arith.constant 0 : i32
    return %c0_i32, %c0_i32_0 : i32, i32
  }
  func.func @transform_10(%arg0: i32) -> (i32, i32) {
    %c0_i32 = arith.constant 0 : i32
    %c0_i32_0 = arith.constant 0 : i32
    %c0_i32_1 = arith.constant 0 : i32
    return %c0_i32, %c0_i32_0 : i32, i32
  }
  func.func @transform_11(%arg0: i32) -> (i32, i32) {
    %c0_i32 = arith.constant 0 : i32
    %c0_i32_0 = arith.constant 0 : i32
    %c0_i32_1 = arith.constant 0 : i32
    return %c0_i32, %c0_i32_0 : i32, i32
  }
}

</mosaic_0001>

<llo_original>
// kernel: lstm_forward.1
$region0: #{lstm_forward.1}
  #allocation0 [shape = 'u32[]', space=smem, size = 0x4, offset = 0x4, fixed_abs, tag = 'smem constant byte address 0x4 - core index']
  #allocation1 [shape = 'u32[144,128]{1,0:T(1,128)}', space=vmem, size = 0x12000, scoped, tag = 'internal scratch']
  #allocation2 [shape = 'f32[1,1]{1,0:T(1,128)S(1)}', space=vmem, size = 0x200, scoped, tag = 'scoped memory for lstm_forward.1']
  %s0 = inlined_call_operand.vmem [shape: f32[8,2,5], index: 0, kind: input, shape index: {}]
  %s1 = inlined_call_operand.vmem [shape: f32[5,64], index: 1, kind: input, shape index: {}]
  %s2 = inlined_call_operand.vmem [shape: f32[1,64], index: 2, kind: input, shape index: {}]
  %s3 = inlined_call_operand.vmem [shape: f32[64,128], index: 3, kind: input, shape index: {}]
  %s4 = inlined_call_operand.vmem [shape: f32[1,128], index: 4, kind: input, shape index: {}]
  %s5 = inlined_call_operand.vmem [shape: f32[128,80], index: 5, kind: input, shape index: {}]
  %s6 = inlined_call_operand.vmem [shape: f32[20,80], index: 6, kind: input, shape index: {}]
  %s7 = inlined_call_operand.vmem [shape: f32[1,80], index: 7, kind: input, shape index: {}]
  %s8 = inlined_call_operand.vmem [shape: f32[128,1], index: 8, kind: input, shape index: {}]
  %s9 = inlined_call_operand.vmem [shape: f32[20,1], index: 9, kind: input, shape index: {}]
  %s10 = inlined_call_operand.<no memory space> [shape: f32[1,1], index: 10, kind: input, shape index: {}]
  %s11 = inlined_call_operand.vmem [shape: f32[2,1], index: 11, kind: output, shape index: {}]
  %s12 = sld [smem:[#allocation0]]
  $region54: #{lstm_forward.1} parent=0
    _
  %s14 = ssub.s32 1, %s12
  %s15 = scalar_select 0, %s14, %s12
  %v16 = vstv %s10
  %17 = vst [vmem:[#allocation2] sm:$0x1] %v16
  // Predicated region
  $region2: #{lstm_forward.1} parent=0 // pred_check
    _
  $region3: #{lstm_forward.1} parent=0 // pred_check_branch
    %19 = sbr.rel (0) target = $region5
  $region4: #{lstm_forward.1} parent=0 // pred_region
    _
  $region5: #{lstm_forward.1} parent=0 // pred_fallthru
    _
  // Predicated region
  $region6: #{lstm_forward.1} parent=0 // pred_check
    _
  $region7: #{lstm_forward.1} parent=0 // pred_check_branch
    %21 = sbr.rel (0) target = $region9
  $region8: #{lstm_forward.1} parent=0 // pred_region
    _
  $region9: #{lstm_forward.1} parent=0 // pred_fallthru
    _
  // Predicated region
  $region10: #{lstm_forward.1} parent=0 // pred_check
    _
  $region11: #{lstm_forward.1} parent=0 // pred_check_branch
    %23 = sbr.rel (0) target = $region13
  $region12: #{lstm_forward.1} parent=0 // pred_region
    _
  $region13: #{lstm_forward.1} parent=0 // pred_fallthru
    _
  // Predicated region
  $region14: #{lstm_forward.1} parent=0 // pred_check
    _
  $region15: #{lstm_forward.1} parent=0 // pred_check_branch
    %25 = sbr.rel (0) target = $region17
  $region16: #{lstm_forward.1} parent=0 // pred_region
    _
  $region17: #{lstm_forward.1} parent=0 // pred_fallthru
    _
  // Predicated region
  $region18: #{lstm_forward.1} parent=0 // pred_check
    _
  $region19: #{lstm_forward.1} parent=0 // pred_check_branch
    %27 = sbr.rel (0) target = $region21
  $region20: #{lstm_forward.1} parent=0 // pred_region
    _
  $region21: #{lstm_forward.1} parent=0 // pred_fallthru
    _
  // Predicated region
  $region22: #{lstm_forward.1} parent=0 // pred_check
    _
  $region23: #{lstm_forward.1} parent=0 // pred_check_branch
    %29 = sbr.rel (0) target = $region25
  $region24: #{lstm_forward.1} parent=0 // pred_region
    _
  $region25: #{lstm_forward.1} parent=0 // pred_fallthru
    _
  // Predicated region
  $region26: #{lstm_forward.1} parent=0 // pred_check
    _
  $region27: #{lstm_forward.1} parent=0 // pred_check_branch
    %31 = sbr.rel (0) target = $region29
  $region28: #{lstm_forward.1} parent=0 // pred_region
    _
  $region29: #{lstm_forward.1} parent=0 // pred_fallthru
    _
  // Predicated region
  $region30: #{lstm_forward.1} parent=0 // pred_check
    _
  $region31: #{lstm_forward.1} parent=0 // pred_check_branch
    %33 = sbr.rel (0) target = $region33
  $region32: #{lstm_forward.1} parent=0 // pred_region
    _
  $region33: #{lstm_forward.1} parent=0 // pred_fallthru
    _
  // Predicated region
  $region34: #{lstm_forward.1} parent=0 // pred_check
    _
  $region35: #{lstm_forward.1} parent=0 // pred_check_branch
    %35 = sbr.rel (0) target = $region37
  $region36: #{lstm_forward.1} parent=0 // pred_region
    _
  $region37: #{lstm_forward.1} parent=0 // pred_fallthru
    _
  // Predicated region
  $region38: #{lstm_forward.1} parent=0 // pred_check
    _
  $region39: #{lstm_forward.1} parent=0 // pred_check_branch
    %37 = sbr.rel (0) target = $region41
  $region40: #{lstm_forward.1} parent=0 // pred_region
    _
  $region41: #{lstm_forward.1} parent=0 // pred_fallthru
    _
  // Predicated region
  $region42: #{lstm_forward.1} parent=0 // pred_check
    _
  $region43: #{lstm_forward.1} parent=0 // pred_check_branch
    %39 = sbr.rel (0) target = $region45
  $region44: #{lstm_forward.1} parent=0 // pred_region
    _
  $region45: #{lstm_forward.1} parent=0 // pred_fallthru
    _
  %v40 = vld [vmem:[%s0] sm:$0x3]
  %v41 = vld [vmem:[%s0 + $0x2] sm:$0x3]
  %v42 = vld [vmem:[%s0 + $0x4] sm:$0x3]
  %v43 = vld [vmem:[%s0 + $0x6] sm:$0x3]
  %v44 = vld [vmem:[%s0 + $0x8] sm:$0x3]
  %v45 = vld [vmem:[%s0 + $0xa] sm:$0x3]
  %v46 = vld [vmem:[%s0 + $0xc] sm:$0x3]
  %v47 = vld [vmem:[%s0 + $0xe] sm:$0x3]
  %v48 = vld [vmem:[%s1] sm:$0x1f]
  %v49 = vld [vmem:[%s2] sm:$0x1]
  %v51 = vlaneseq
  %v52 = vshrl.u32 %v51, 7
  %v53 = vsub.s32 0, %v52
  %v54 = vrot.slane %v49, %v53
  %v64 = vcombine.low %v40, %v41
  %v65 = vcombine.low %v42, %v43
  %v67 = vunpack.c.l.s4 1983009808
  %v68 = vunpack.c.0.s8 %v67
  %v69 = vlaneseq
  %v70 = vshrl.u32 %v69, 7
  %v71 = vsub.s32 %v68, %v70
  %v72 = vrot.slane %v64, %v71
  %v74 = vunpack.c.l.s4 1983009808
  %v75 = vunpack.c.0.s8 %v74
  %v76 = vlaneseq
  %v77 = vshrl.u32 %v76, 7
  %v78 = vsub.s32 %v75, %v77
  %v79 = vrot.slane %v65, %v78
  %v80 = vcombine.low %v72, %v79
  %v81 = vcombine.low %v44, %v45
  %v82 = vcombine.low %v46, %v47
  %v84 = vunpack.c.l.s4 1983009808
  %v85 = vunpack.c.0.s8 %v84
  %v86 = vlaneseq
  %v87 = vshrl.u32 %v86, 7
  %v88 = vsub.s32 %v85, %v87
  %v89 = vrot.slane %v81, %v88
  %v91 = vunpack.c.l.s4 1983009808
  %v92 = vunpack.c.0.s8 %v91
  %v93 = vlaneseq
  %v94 = vshrl.u32 %v93, 7
  %v95 = vsub.s32 %v92, %v94
  %v96 = vrot.slane %v82, %v95
  %v97 = vcombine.low %v89, %v96
  %vm98 = vcmask 39936
  %v99 = vsel %vm98, %v80, 0
  %v101 = vsel %vm98, %v97, 0
  %vm103 = vcmask 1044480
  %v105 = vsel %vm103, %v48, 0
  %107 = vmatprep.subr.mxu0 0.0
  %108 = vmatpush1.msra.mxu0 0.0
  %109 = vmatprep.subr.mxu0 0.0
  %110 = vmatpush1.msra.mxu0 0.0
  %111 = vmatprep.subr.mxu0 0.0
  %112 = vmatpush1.msra.mxu0 0.0
  %113 = vmatprep.subr.mxu0 0.0
  %114 = vmatpush1.msra.mxu0 0.0
  %115 = vmatprep.subr.mxu0 0.0
  %116 = vmatpush1.msra.mxu0 0.0
  %117 = vmatprep.subr.mxu0 0.0
  %118 = vmatpush1.msra.mxu0 0.0
  %119 = vmatprep.subr.mxu0 0.0
  %120 = vmatpush1.msra.mxu0 0.0
  %121 = vmatprep.subr.mxu0 0.0
  %122 = vmatpush1.msra.mxu0 0.0
  %123 = vmatprep.subr.mxu0 0.0
  %124 = vmatpush1.msra.mxu0 0.0
  %125 = vmatprep.subr.mxu0 0.0
  %126 = vmatpush1.msra.mxu0 0.0
  %127 = vmatprep.subr.mxu0 0.0
  %128 = vmatpush1.msra.mxu0 0.0
  %129 = vmatprep.subr.mxu0 0.0
  %130 = vmatpush1.msra.mxu0 0.0
  %131 = vmatprep.subr.mxu0 0.0
  %132 = vmatpush1.msra.mxu0 0.0
  %133 = vmatprep.subr.mxu0 0.0
  %134 = vmatpush1.msra.mxu0 0.0
  %135 = vmatprep.subr.mxu0 0.0
  %136 = vmatpush1.msra.mxu0 0.0
  %137 = vmatprep.subr.mxu0 0.0
  %138 = vmatpush1.msra.mxu0 %v105
  %139 = vmatprep.subr.mxu0 0.0
  %140 = vmatpush2.msra.mxu0 0.0
  %141 = vmatprep.subr.mxu0 0.0
  %142 = vmatpush2.msra.mxu0 0.0
  %143 = vmatprep.subr.mxu0 0.0
  %144 = vmatpush2.msra.mxu0 0.0
  %145 = vmatprep.subr.mxu0 0.0
  %146 = vmatpush2.msra.mxu0 0.0
  %147 = vmatprep.subr.mxu0 0.0
  %148 = vmatpush2.msra.mxu0 0.0
  %149 = vmatprep.subr.mxu0 0.0
  %150 = vmatpush2.msra.mxu0 0.0
  %151 = vmatprep.subr.mxu0 0.0
  %152 = vmatpush2.msra.mxu0 0.0
  %153 = vmatprep.subr.mxu0 0.0
  %154 = vmatpush2.msra.mxu0 0.0
  %155 = vmatprep.subr.mxu0 0.0
  %156 = vmatpush2.msra.mxu0 0.0
  %157 = vmatprep.subr.mxu0 0.0
  %158 = vmatpush2.msra.mxu0 0.0
  %159 = vmatprep.subr.mxu0 0.0
  %160 = vmatpush2.msra.mxu0 0.0
  %161 = vmatprep.subr.mxu0 0.0
  %162 = vmatpush2.msra.mxu0 0.0
  %163 = vmatprep.subr.mxu0 0.0
  %164 = vmatpush2.msra.mxu0 0.0
  %165 = vmatprep.subr.mxu0 0.0
  %166 = vmatpush2.msra.mxu0 0.0
  %167 = vmatprep.subr.mxu0 0.0
  %168 = vmatpush2.msra.mxu0 0.0
  %169 = vmatprep.subr.mxu0 0.0
  %170 = vmatpush2.msra.mxu0 0.0
  %171 = vmatprep.mubr.f32.mxu0 0.0
  %172 = vmatmul.mubr.f32.gmra.mxu0 %v99
  %v173 = vpop.f32.mrf.mxu0
  %v174 = vadd.f32 %v54, %v173
  %v175 = vpop.f32.mrf.mxu0
  %176 = vmatprep.mubr.f32.mxu0 0.0
  %177 = vmatmul.mubr.f32.gmra.mxu0 %v101
  %v178 = vpop.f32.mrf.mxu0
  %v179 = vadd.f32 %v54, %v178
  %v180 = vpop.f32.mrf.mxu0
  %181 = vdwg.mxu0
  %vm182 = vcmp.ge.f32.partialorder %v174, 0.0
  %vm183 = vcmp.ge.f32.partialorder %v179, 0.0
  %v184 = vmul.f32 %v174, 0.01
  %v185 = vmul.f32 %v179, 0.01
  %v186 = vsel %vm182, %v174, %v184
  %v187 = vsel %vm183, %v179, %v185
  %v188 = vld [vmem:[%s3] sm:$0xff]
  %v189 = vld [vmem:[%s3 + $0x8] sm:$0xff]
  %v190 = vld [vmem:[%s3 + $0x10] sm:$0xff]
  %v191 = vld [vmem:[%s3 + $0x18] sm:$0xff]
  %v192 = vld [vmem:[%s3 + $0x20] sm:$0xff]
  %v193 = vld [vmem:[%s3 + $0x28] sm:$0xff]
  %v194 = vld [vmem:[%s3 + $0x30] sm:$0xff]
  %v195 = vld [vmem:[%s3 + $0x38] sm:$0xff]
  %v196 = vld [vmem:[%s4] sm:$0x1]
  %v198 = vlaneseq
  %v199 = vshrl.u32 %v198, 7
  %v200 = vsub.s32 0, %v199
  %v201 = vrot.slane %v196, %v200
  %vm203 = vcmask 523264
  %v205 = vsel %vm203, %v186, 0
  %v208 = vsel %vm203, %v187, 0
  %210 = vmatprep.subr.mxu0 0.0
  %211 = vmatpush1.msra.mxu0 0.0
  %212 = vmatprep.subr.mxu0 0.0
  %213 = vmatpush1.msra.mxu0 0.0
  %214 = vmatprep.subr.mxu0 0.0
  %215 = vmatpush1.msra.mxu0 0.0
  %216 = vmatprep.subr.mxu0 0.0
  %217 = vmatpush1.msra.mxu0 0.0
  %218 = vmatprep.subr.mxu0 0.0
  %219 = vmatpush1.msra.mxu0 0.0
  %220 = vmatprep.subr.mxu0 0.0
  %221 = vmatpush1.msra.mxu0 0.0
  %222 = vmatprep.subr.mxu0 0.0
  %223 = vmatpush1.msra.mxu0 0.0
  %224 = vmatprep.subr.mxu0 0.0
  %225 = vmatpush1.msra.mxu0 0.0
  %226 = vmatprep.subr.mxu0 0.0
  %227 = vmatpush1.msra.mxu0 %v195
  %228 = vmatprep.subr.mxu0 0.0
  %229 = vmatpush1.msra.mxu0 %v194
  %230 = vmatprep.subr.mxu0 0.0
  %231 = vmatpush1.msra.mxu0 %v193
  %232 = vmatprep.subr.mxu0 0.0
  %233 = vmatpush1.msra.mxu0 %v192
  %234 = vmatprep.subr.mxu0 0.0
  %235 = vmatpush1.msra.mxu0 %v191
  %236 = vmatprep.subr.mxu0 0.0
  %237 = vmatpush1.msra.mxu0 %v190
  %238 = vmatprep.subr.mxu0 0.0
  %239 = vmatpush1.msra.mxu0 %v189
  %240 = vmatprep.subr.mxu0 0.0
  %241 = vmatpush1.msra.mxu0 %v188
  %242 = vmatprep.subr.mxu0 0.0
  %243 = vmatpush2.msra.mxu0 0.0
  %244 = vmatprep.subr.mxu0 0.0
  %245 = vmatpush2.msra.mxu0 0.0
  %246 = vmatprep.subr.mxu0 0.0
  %247 = vmatpush2.msra.mxu0 0.0
  %248 = vmatprep.subr.mxu0 0.0
  %249 = vmatpush2.msra.mxu0 0.0
  %250 = vmatprep.subr.mxu0 0.0
  %251 = vmatpush2.msra.mxu0 0.0
  %252 = vmatprep.subr.mxu0 0.0
  %253 = vmatpush2.msra.mxu0 0.0
  %254 = vmatprep.subr.mxu0 0.0
  %255 = vmatpush2.msra.mxu0 0.0
  %256 = vmatprep.subr.mxu0 0.0
  %257 = vmatpush2.msra.mxu0 0.0
  %258 = vmatprep.subr.mxu0 0.0
  %259 = vmatpush2.msra.mxu0 0.0
  %260 = vmatprep.subr.mxu0 0.0
  %261 = vmatpush2.msra.mxu0 0.0
  %262 = vmatprep.subr.mxu0 0.0
  %263 = vmatpush2.msra.mxu0 0.0
  %264 = vmatprep.subr.mxu0 0.0
  %265 = vmatpush2.msra.mxu0 0.0
  %266 = vmatprep.subr.mxu0 0.0
  %267 = vmatpush2.msra.mxu0 0.0
  %268 = vmatprep.subr.mxu0 0.0
  %269 = vmatpush2.msra.mxu0 0.0
  %270 = vmatprep.subr.mxu0 0.0
  %271 = vmatpush2.msra.mxu0 0.0
  %272 = vmatprep.subr.mxu0 0.0
  %273 = vmatpush2.msra.mxu0 0.0
  %274 = vmatprep.mubr.f32.mxu0 0.0
  %275 = vmatmul.mubr.f32.gmra.mxu0 %v205
  %v276 = vpop.f32.mrf.mxu0
  %v277 = vadd.f32 %v201, %v276
  %v278 = vpop.f32.mrf.mxu0
  %279 = vmatprep.mubr.f32.mxu0 0.0
  %280 = vmatmul.mubr.f32.gmra.mxu0 %v208
  %v281 = vpop.f32.mrf.mxu0
  %v282 = vadd.f32 %v201, %v281
  %v283 = vpop.f32.mrf.mxu0
  %284 = vdwg.mxu0
  %vm285 = vcmp.ge.f32.partialorder %v277, 0.0
  %vm286 = vcmp.ge.f32.partialorder %v282, 0.0
  %v287 = vmul.f32 %v277, 0.01
  %v288 = vmul.f32 %v282, 0.01
  %v289 = vsel %vm285, %v277, %v287
  %v290 = vsel %vm286, %v282, %v288
  %v291 = vld [vmem:[%s5] sm:$0xff]
  %v292 = vld [vmem:[%s5 + $0x8] sm:$0xff]
  %v293 = vld [vmem:[%s5 + $0x10] sm:$0xff]
  %v294 = vld [vmem:[%s5 + $0x18] sm:$0xff]
  %v295 = vld [vmem:[%s5 + $0x20] sm:$0xff]
  %v296 = vld [vmem:[%s5 + $0x28] sm:$0xff]
  %v297 = vld [vmem:[%s5 + $0x30] sm:$0xff]
  %v298 = vld [vmem:[%s5 + $0x38] sm:$0xff]
  %v299 = vld [vmem:[%s5 + $0x40] sm:$0xff]
  %v300 = vld [vmem:[%s5 + $0x48] sm:$0xff]
  %v301 = vld [vmem:[%s5 + $0x50] sm:$0xff]
  %v302 = vld [vmem:[%s5 + $0x58] sm:$0xff]
  %v303 = vld [vmem:[%s5 + $0x60] sm:$0xff]
  %v304 = vld [vmem:[%s5 + $0x68] sm:$0xff]
  %v305 = vld [vmem:[%s5 + $0x70] sm:$0xff]
  %v306 = vld [vmem:[%s5 + $0x78] sm:$0xff]
  %v307 = vld [vmem:[%s7] sm:$0x1]
  %v309 = vlaneseq
  %v310 = vshrl.u32 %v309, 7
  %v311 = vsub.s32 0, %v310
  %v312 = vrot.slane %v307, %v311
  %314 = vmatprep.subr.mxu0 0.0
  %315 = vmatpush1.msra.mxu0 %v306
  %316 = vmatprep.subr.mxu0 0.0
  %317 = vmatpush1.msra.mxu0 %v305
  %318 = vmatprep.subr.mxu0 0.0
  %319 = vmatpush1.msra.mxu0 %v304
  %320 = vmatprep.subr.mxu0 0.0
  %321 = vmatpush1.msra.mxu0 %v303
  %322 = vmatprep.subr.mxu0 0.0
  %323 = vmatpush1.msra.mxu0 %v302
  %324 = vmatprep.subr.mxu0 0.0
  %325 = vmatpush1.msra.mxu0 %v301
  %326 = vmatprep.subr.mxu0 0.0
  %327 = vmatpush1.msra.mxu0 %v300
  %328 = vmatprep.subr.mxu0 0.0
  %329 = vmatpush1.msra.mxu0 %v299
  %330 = vmatprep.subr.mxu0 0.0
  %331 = vmatpush1.msra.mxu0 %v298
  %332 = vmatprep.subr.mxu0 0.0
  %333 = vmatpush1.msra.mxu0 %v297
  %334 = vmatprep.subr.mxu0 0.0
  %335 = vmatpush1.msra.mxu0 %v296
  %336 = vmatprep.subr.mxu0 0.0
  %337 = vmatpush1.msra.mxu0 %v295
  %338 = vmatprep.subr.mxu0 0.0
  %339 = vmatpush1.msra.mxu0 %v294
  %340 = vmatprep.subr.mxu0 0.0
  %341 = vmatpush1.msra.mxu0 %v293
  %342 = vmatprep.subr.mxu0 0.0
  %343 = vmatpush1.msra.mxu0 %v292
  %344 = vmatprep.subr.mxu0 0.0
  %345 = vmatpush1.msra.mxu0 %v291
  %346 = vmatprep.subr.mxu0 0.0
  %347 = vmatpush2.msra.mxu0 0.0
  %348 = vmatprep.subr.mxu0 0.0
  %349 = vmatpush2.msra.mxu0 0.0
  %350 = vmatprep.subr.mxu0 0.0
  %351 = vmatpush2.msra.mxu0 0.0
  %352 = vmatprep.subr.mxu0 0.0
  %353 = vmatpush2.msra.mxu0 0.0
  %354 = vmatprep.subr.mxu0 0.0
  %355 = vmatpush2.msra.mxu0 0.0
  %356 = vmatprep.subr.mxu0 0.0
  %357 = vmatpush2.msra.mxu0 0.0
  %358 = vmatprep.subr.mxu0 0.0
  %359 = vmatpush2.msra.mxu0 0.0
  %360 = vmatprep.subr.mxu0 0.0
  %361 = vmatpush2.msra.mxu0 0.0
  %362 = vmatprep.subr.mxu0 0.0
  %363 = vmatpush2.msra.mxu0 0.0
  %364 = vmatprep.subr.mxu0 0.0
  %365 = vmatpush2.msra.mxu0 0.0
  %366 = vmatprep.subr.mxu0 0.0
  %367 = vmatpush2.msra.mxu0 0.0
  %368 = vmatprep.subr.mxu0 0.0
  %369 = vmatpush2.msra.mxu0 0.0
  %370 = vmatprep.subr.mxu0 0.0
  %371 = vmatpush2.msra.mxu0 0.0
  %372 = vmatprep.subr.mxu0 0.0
  %373 = vmatpush2.msra.mxu0 0.0
  %374 = vmatprep.subr.mxu0 0.0
  %375 = vmatpush2.msra.mxu0 0.0
  %376 = vmatprep.subr.mxu0 0.0
  %377 = vmatpush2.msra.mxu0 0.0
  %378 = vmatprep.mubr.f32.mxu0 0.0
  %379 = vmatmul.mubr.f32.gmra.mxu0 %v289
  %v380 = vpop.f32.mrf.mxu0
  %v381 = vadd.f32 %v312, %v380
  %v382 = vpop.f32.mrf.mxu0
  %383 = vmatprep.mubr.f32.mxu0 0.0
  %384 = vmatmul.mubr.f32.gmra.mxu0 %v290
  %v385 = vpop.f32.mrf.mxu0
  %v386 = vadd.f32 %v312, %v385
  %v387 = vpop.f32.mrf.mxu0
  %388 = vdwg.mxu0
  %v391 = vcombine.high %v381, %v381
  %v393 = vunpack.c.l.s4 1983009808
  %v394 = vunpack.c.0.s8 %v393
  %v395 = vlaneseq
  %v396 = vshrl.u32 %v395, 7
  %v397 = vsub.s32 %v394, %v396
  %v398 = vrot.slane %v381, %v397
  %v400 = vunpack.c.l.s4 1983009808
  %v401 = vunpack.c.0.s8 %v400
  %v402 = vlaneseq
  %v403 = vshrl.u32 %v402, 7
  %v404 = vsub.s32 %v401, %v403
  %v405 = vrot.slane %v391, %v404
  %v406 = vcombine.high %v398, %v398
  %v407 = vcombine.high %v405, %v405
  %v408 = vcombine.high %v386, %v386
  %v410 = vunpack.c.l.s4 1983009808
  %v411 = vunpack.c.0.s8 %v410
  %v412 = vlaneseq
  %v413 = vshrl.u32 %v412, 7
  %v414 = vsub.s32 %v411, %v413
  %v415 = vrot.slane %v386, %v414
  %v417 = vunpack.c.l.s4 1983009808
  %v418 = vunpack.c.0.s8 %v417
  %v419 = vlaneseq
  %v420 = vshrl.u32 %v419, 7
  %v421 = vsub.s32 %v418, %v420
  %v422 = vrot.slane %v408, %v421
  %v423 = vcombine.high %v415, %v415
  %v431 = vld [vmem:[%s6] sm:$0xff]
  %v432 = vld [vmem:[%s6 + $0x8] sm:$0xff]
  %v433 = vld [vmem:[%s6 + $0x10] sm:$0xf]
  %v434 = vlaneseq
  %v435 = vand.u32 %v434, 127
  %vm436 = vcmp.ge.s32.totalorder %v435, 40
  %vm437 = vcmp.lt.s32.totalorder %v435, 60
  %vm438 = vmand %vm436, %vm437
  %vm439 = vcmask 162816
  %v441 = vsel %vm439, 0.0, 0
  %vm443 = vcmask 1043456
  %v445 = vsel %vm443, %v433, 0
  %447 = vmatprep.subr.mxu0 0.0
  %448 = vmatpush1.msra.mxu0 0.0
  %449 = vmatprep.subr.mxu0 0.0
  %450 = vmatpush1.msra.mxu0 0.0
  %451 = vmatprep.subr.mxu0 0.0
  %452 = vmatpush1.msra.mxu0 0.0
  %453 = vmatprep.subr.mxu0 0.0
  %454 = vmatpush1.msra.mxu0 0.0
  %455 = vmatprep.subr.mxu0 0.0
  %456 = vmatpush1.msra.mxu0 0.0
  %457 = vmatprep.subr.mxu0 0.0
  %458 = vmatpush1.msra.mxu0 0.0
  %459 = vmatprep.subr.mxu0 0.0
  %460 = vmatpush1.msra.mxu0 0.0
  %461 = vmatprep.subr.mxu0 0.0
  %462 = vmatpush1.msra.mxu0 0.0
  %463 = vmatprep.subr.mxu0 0.0
  %464 = vmatpush1.msra.mxu0 0.0
  %465 = vmatprep.subr.mxu0 0.0
  %466 = vmatpush1.msra.mxu0 0.0
  %467 = vmatprep.subr.mxu0 0.0
  %468 = vmatpush1.msra.mxu0 0.0
  %469 = vmatprep.subr.mxu0 0.0
  %470 = vmatpush1.msra.mxu0 0.0
  %471 = vmatprep.subr.mxu0 0.0
  %472 = vmatpush1.msra.mxu0 0.0
  %473 = vmatprep.subr.mxu0 0.0
  %474 = vmatpush1.msra.mxu0 %v445
  %475 = vmatprep.subr.mxu0 0.0
  %476 = vmatpush1.msra.mxu0 %v432
  %477 = vmatprep.subr.mxu0 0.0
  %478 = vmatpush1.msra.mxu0 %v431
  %479 = vmatprep.subr.mxu0 0.0
  %480 = vmatpush2.msra.mxu0 0.0
  %481 = vmatprep.subr.mxu0 0.0
  %482 = vmatpush2.msra.mxu0 0.0
  %483 = vmatprep.subr.mxu0 0.0
  %484 = vmatpush2.msra.mxu0 0.0
  %485 = vmatprep.subr.mxu0 0.0
  %486 = vmatpush2.msra.mxu0 0.0
  %487 = vmatprep.subr.mxu0 0.0
  %488 = vmatpush2.msra.mxu0 0.0
  %489 = vmatprep.subr.mxu0 0.0
  %490 = vmatpush2.msra.mxu0 0.0
  %491 = vmatprep.subr.mxu0 0.0
  %492 = vmatpush2.msra.mxu0 0.0
  %493 = vmatprep.subr.mxu0 0.0
  %494 = vmatpush2.msra.mxu0 0.0
  %495 = vmatprep.subr.mxu0 0.0
  %496 = vmatpush2.msra.mxu0 0.0
  %497 = vmatprep.subr.mxu0 0.0
  %498 = vmatpush2.msra.mxu0 0.0
  %499 = vmatprep.subr.mxu0 0.0
  %500 = vmatpush2.msra.mxu0 0.0
  %501 = vmatprep.subr.mxu0 0.0
  %502 = vmatpush2.msra.mxu0 0.0
  %503 = vmatprep.subr.mxu0 0.0
  %504 = vmatpush2.msra.mxu0 0.0
  %505 = vmatprep.subr.mxu0 0.0
  %506 = vmatpush2.msra.mxu0 0.0
  %507 = vmatprep.subr.mxu0 0.0
  %508 = vmatpush2.msra.mxu0 0.0
  %509 = vmatprep.subr.mxu0 0.0
  %510 = vmatpush2.msra.mxu0 0.0
  %511 = vmatprep.mubr.f32.mxu0 0.0
  %512 = vmatmul.mubr.f32.gmra.mxu0 %v441
  %v513 = vpop.f32.mrf.mxu0
  %v514 = vadd.f32 0.0, %v513
  %v515 = vpop.f32.mrf.mxu0
  %516 = vdwg.mxu0
  %v517 = vadd.f32 %v398, %v514
  %v518 = vmul.f32 %v517, 0.5
  %v519 = vtanh.pop %v518
  %v520 = vmul.f32 %v519, 0.5
  %v521 = vadd.f32 %v520, 0.5
  %v522 = vtanh.pop %v517
  %v523 = vsel %vm438, %v522, %v521
  %v524 = vmul.f32 %v523, 0.0
  %526 = vrot.lane.b32.xlu0 %v523, 88
  %v527 = vpop.permute.xlu0 %526
  %v529 = vmul.f32 %v523, %v527
  %531 = vrot.lane.b32.xlu0 %v529, 20
  %v532 = vpop.permute.xlu0 %531
  %v534 = vadd.f32 %v524, %v532
  %v535 = vtanh.pop %v534
  %537 = vrot.lane.b32.xlu0 %v535, 40
  %v538 = vpop.permute.xlu0 %537
  %v540 = vmul.f32 %v523, %v538
  %542 = vrot.lane.b32.xlu0 %v540, 68
  %v543 = vpop.permute.xlu0 %542
  %v544 = vsel %vm439, %v543, 0
  %546 = vmatprep.subr.mxu0 0.0
  %547 = vmatpush1.msra.mxu0 0.0
  %548 = vmatprep.subr.mxu0 0.0
  %549 = vmatpush1.msra.mxu0 0.0
  %550 = vmatprep.subr.mxu0 0.0
  %551 = vmatpush1.msra.mxu0 0.0
  %552 = vmatprep.subr.mxu0 0.0
  %553 = vmatpush1.msra.mxu0 0.0
  %554 = vmatprep.subr.mxu0 0.0
  %555 = vmatpush1.msra.mxu0 0.0
  %556 = vmatprep.subr.mxu0 0.0
  %557 = vmatpush1.msra.mxu0 0.0
  %558 = vmatprep.subr.mxu0 0.0
  %559 = vmatpush1.msra.mxu0 0.0
  %560 = vmatprep.subr.mxu0 0.0
  %561 = vmatpush1.msra.mxu0 0.0
  %562 = vmatprep.subr.mxu0 0.0
  %563 = vmatpush1.msra.mxu0 0.0
  %564 = vmatprep.subr.mxu0 0.0
  %565 = vmatpush1.msra.mxu0 0.0
  %566 = vmatprep.subr.mxu0 0.0
  %567 = vmatpush1.msra.mxu0 0.0
  %568 = vmatprep.subr.mxu0 0.0
  %569 = vmatpush1.msra.mxu0 0.0
  %570 = vmatprep.subr.mxu0 0.0
  %571 = vmatpush1.msra.mxu0 0.0
  %572 = vmatprep.subr.mxu0 0.0
  %573 = vmatpush1.msra.mxu0 %v445
  %574 = vmatprep.subr.mxu0 0.0
  %575 = vmatpush1.msra.mxu0 %v432
  %576 = vmatprep.subr.mxu0 0.0
  %577 = vmatpush1.msra.mxu0 %v431
  %578 = vmatprep.subr.mxu0 0.0
  %579 = vmatpush2.msra.mxu0 0.0
  %580 = vmatprep.subr.mxu0 0.0
  %581 = vmatpush2.msra.mxu0 0.0
  %582 = vmatprep.subr.mxu0 0.0
  %583 = vmatpush2.msra.mxu0 0.0
  %584 = vmatprep.subr.mxu0 0.0
  %585 = vmatpush2.msra.mxu0 0.0
  %586 = vmatprep.subr.mxu0 0.0
  %587 = vmatpush2.msra.mxu0 0.0
  %588 = vmatprep.subr.mxu0 0.0
  %589 = vmatpush2.msra.mxu0 0.0
  %590 = vmatprep.subr.mxu0 0.0
  %591 = vmatpush2.msra.mxu0 0.0
  %592 = vmatprep.subr.mxu0 0.0
  %593 = vmatpush2.msra.mxu0 0.0
  %594 = vmatprep.subr.mxu0 0.0
  %595 = vmatpush2.msra.mxu0 0.0
  %596 = vmatprep.subr.mxu0 0.0
  %597 = vmatpush2.msra.mxu0 0.0
  %598 = vmatprep.subr.mxu0 0.0
  %599 = vmatpush2.msra.mxu0 0.0
  %600 = vmatprep.subr.mxu0 0.0
  %601 = vmatpush2.msra.mxu0 0.0
  %602 = vmatprep.subr.mxu0 0.0
  %603 = vmatpush2.msra.mxu0 0.0
  %604 = vmatprep.subr.mxu0 0.0
  %605 = vmatpush2.msra.mxu0 0.0
  %606 = vmatprep.subr.mxu0 0.0
  %607 = vmatpush2.msra.mxu0 0.0
  %608 = vmatprep.subr.mxu0 0.0
  %609 = vmatpush2.msra.mxu0 0.0
  %610 = vmatprep.mubr.f32.mxu0 0.0
  %611 = vmatmul.mubr.f32.gmra.mxu0 %v544
  %v612 = vpop.f32.mrf.mxu0
  %v613 = vadd.f32 0.0, %v612
  %v614 = vpop.f32.mrf.mxu0
  %615 = vdwg.mxu0
  %v616 = vadd.f32 %v406, %v613
  %v617 = vmul.f32 %v616, 0.5
  %v618 = vtanh.pop %v617
  %v619 = vmul.f32 %v618, 0.5
  %v620 = vadd.f32 %v619, 0.5
  %v621 = vtanh.pop %v616
  %v622 = vsel %vm438, %v621, %v620
  %v623 = vmul.f32 %v622, %v534
  %625 = vrot.lane.b32.xlu0 %v622, 88
  %v626 = vpop.permute.xlu0 %625
  %v628 = vmul.f32 %v622, %v626
  %630 = vrot.lane.b32.xlu0 %v628, 20
  %v631 = vpop.permute.xlu0 %630
  %v633 = vadd.f32 %v623, %v631
  %v634 = vtanh.pop %v633
  %636 = vrot.lane.b32.xlu0 %v634, 40
  %v637 = vpop.permute.xlu0 %636
  %v639 = vmul.f32 %v622, %v637
  %641 = vrot.lane.b32.xlu0 %v639, 68
  %v642 = vpop.permute.xlu0 %641
  %v643 = vsel %vm439, %v642, 0
  %645 = vmatprep.subr.mxu0 0.0
  %646 = vmatpush1.msra.mxu0 0.0
  %647 = vmatprep.subr.mxu0 0.0
  %648 = vmatpush1.msra.mxu0 0.0
  %649 = vmatprep.subr.mxu0 0.0
  %650 = vmatpush1.msra.mxu0 0.0
  %651 = vmatprep.subr.mxu0 0.0
  %652 = vmatpush1.msra.mxu0 0.0
  %653 = vmatprep.subr.mxu0 0.0
  %654 = vmatpush1.msra.mxu0 0.0
  %655 = vmatprep.subr.mxu0 0.0
  %656 = vmatpush1.msra.mxu0 0.0
  %657 = vmatprep.subr.mxu0 0.0
  %658 = vmatpush1.msra.mxu0 0.0
  %659 = vmatprep.subr.mxu0 0.0
  %660 = vmatpush1.msra.mxu0 0.0
  %661 = vmatprep.subr.mxu0 0.0
  %662 = vmatpush1.msra.mxu0 0.0
  %663 = vmatprep.subr.mxu0 0.0
  %664 = vmatpush1.msra.mxu0 0.0
  %665 = vmatprep.subr.mxu0 0.0
  %666 = vmatpush1.msra.mxu0 0.0
  %667 = vmatprep.subr.mxu0 0.0
  %668 = vmatpush1.msra.mxu0 0.0
  %669 = vmatprep.subr.mxu0 0.0
  %670 = vmatpush1.msra.mxu0 0.0
  %671 = vmatprep.subr.mxu0 0.0
  %672 = vmatpush1.msra.mxu0 %v445
  %673 = vmatprep.subr.mxu0 0.0
  %674 = vmatpush1.msra.mxu0 %v432
  %675 = vmatprep.subr.mxu0 0.0
  %676 = vmatpush1.msra.mxu0 %v431
  %677 = vmatprep.subr.mxu0 0.0
  %678 = vmatpush2.msra.mxu0 0.0
  %679 = vmatprep.subr.mxu0 0.0
  %680 = vmatpush2.msra.mxu0 0.0
  %681 = vmatprep.subr.mxu0 0.0
  %682 = vmatpush2.msra.mxu0 0.0
  %683 = vmatprep.subr.mxu0 0.0
  %684 = vmatpush2.msra.mxu0 0.0
  %685 = vmatprep.subr.mxu0 0.0
  %686 = vmatpush2.msra.mxu0 0.0
  %687 = vmatprep.subr.mxu0 0.0
  %688 = vmatpush2.msra.mxu0 0.0
  %689 = vmatprep.subr.mxu0 0.0
  %690 = vmatpush2.msra.mxu0 0.0
  %691 = vmatprep.subr.mxu0 0.0
  %692 = vmatpush2.msra.mxu0 0.0
  %693 = vmatprep.subr.mxu0 0.0
  %694 = vmatpush2.msra.mxu0 0.0
  %695 = vmatprep.subr.mxu0 0.0
  %696 = vmatpush2.msra.mxu0 0.0
  %697 = vmatprep.subr.mxu0 0.0
  %698 = vmatpush2.msra.mxu0 0.0
  %699 = vmatprep.subr.mxu0 0.0
  %700 = vmatpush2.msra.mxu0 0.0
  %701 = vmatprep.subr.mxu0 0.0
  %702 = vmatpush2.msra.mxu0 0.0
  %703 = vmatprep.subr.mxu0 0.0
  %704 = vmatpush2.msra.mxu0 0.0
  %705 = vmatprep.subr.mxu0 0.0
  %706 = vmatpush2.msra.mxu0 0.0
  %707 = vmatprep.subr.mxu0 0.0
  %708 = vmatpush2.msra.mxu0 0.0
  %709 = vmatprep.mubr.f32.mxu0 0.0
  %710 = vmatmul.mubr.f32.gmra.mxu0 %v643
  %v711 = vpop.f32.mrf.mxu0
  %v712 = vadd.f32 0.0, %v711
  %v713 = vpop.f32.mrf.mxu0
  %714 = vdwg.mxu0
  %v715 = vadd.f32 %v405, %v712
  %v716 = vmul.f32 %v715, 0.5
  %v717 = vtanh.pop %v716
  %v718 = vmul.f32 %v717, 0.5
  %v719 = vadd.f32 %v718, 0.5
  %v720 = vtanh.pop %v715
  %v721 = vsel %vm438, %v720, %v719
  %v722 = vmul.f32 %v721, %v633
  %724 = vrot.lane.b32.xlu0 %v721, 88
  %v725 = vpop.permute.xlu0 %724
  %v727 = vmul.f32 %v721, %v725
  %729 = vrot.lane.b32.xlu0 %v727, 20
  %v730 = vpop.permute.xlu0 %729
  %v732 = vadd.f32 %v722, %v730
  %v733 = vtanh.pop %v732
  %735 = vrot.lane.b32.xlu0 %v733, 40
  %v736 = vpop.permute.xlu0 %735
  %v738 = vmul.f32 %v721, %v736
  %740 = vrot.lane.b32.xlu0 %v738, 68
  %v741 = vpop.permute.xlu0 %740
  %v742 = vsel %vm439, %v741, 0
  %744 = vmatprep.subr.mxu0 0.0
  %745 = vmatpush1.msra.mxu0 0.0
  %746 = vmatprep.subr.mxu0 0.0
  %747 = vmatpush1.msra.mxu0 0.0
  %748 = vmatprep.subr.mxu0 0.0
  %749 = vmatpush1.msra.mxu0 0.0
  %750 = vmatprep.subr.mxu0 0.0
  %751 = vmatpush1.msra.mxu0 0.0
  %752 = vmatprep.subr.mxu0 0.0
  %753 = vmatpush1.msra.mxu0 0.0
  %754 = vmatprep.subr.mxu0 0.0
  %755 = vmatpush1.msra.mxu0 0.0
  %756 = vmatprep.subr.mxu0 0.0
  %757 = vmatpush1.msra.mxu0 0.0
  %758 = vmatprep.subr.mxu0 0.0
  %759 = vmatpush1.msra.mxu0 0.0
  %760 = vmatprep.subr.mxu0 0.0
  %761 = vmatpush1.msra.mxu0 0.0
  %762 = vmatprep.subr.mxu0 0.0
  %763 = vmatpush1.msra.mxu0 0.0
  %764 = vmatprep.subr.mxu0 0.0
  %765 = vmatpush1.msra.mxu0 0.0
  %766 = vmatprep.subr.mxu0 0.0
  %767 = vmatpush1.msra.mxu0 0.0
  %768 = vmatprep.subr.mxu0 0.0
  %769 = vmatpush1.msra.mxu0 0.0
  %770 = vmatprep.subr.mxu0 0.0
  %771 = vmatpush1.msra.mxu0 %v445
  %772 = vmatprep.subr.mxu0 0.0
  %773 = vmatpush1.msra.mxu0 %v432
  %774 = vmatprep.subr.mxu0 0.0
  %775 = vmatpush1.msra.mxu0 %v431
  %776 = vmatprep.subr.mxu0 0.0
  %777 = vmatpush2.msra.mxu0 0.0
  %778 = vmatprep.subr.mxu0 0.0
  %779 = vmatpush2.msra.mxu0 0.0
  %780 = vmatprep.subr.mxu0 0.0
  %781 = vmatpush2.msra.mxu0 0.0
  %782 = vmatprep.subr.mxu0 0.0
  %783 = vmatpush2.msra.mxu0 0.0
  %784 = vmatprep.subr.mxu0 0.0
  %785 = vmatpush2.msra.mxu0 0.0
  %786 = vmatprep.subr.mxu0 0.0
  %787 = vmatpush2.msra.mxu0 0.0
  %788 = vmatprep.subr.mxu0 0.0
  %789 = vmatpush2.msra.mxu0 0.0
  %790 = vmatprep.subr.mxu0 0.0
  %791 = vmatpush2.msra.mxu0 0.0
  %792 = vmatprep.subr.mxu0 0.0
  %793 = vmatpush2.msra.mxu0 0.0
  %794 = vmatprep.subr.mxu0 0.0
  %795 = vmatpush2.msra.mxu0 0.0
  %796 = vmatprep.subr.mxu0 0.0
  %797 = vmatpush2.msra.mxu0 0.0
  %798 = vmatprep.subr.mxu0 0.0
  %799 = vmatpush2.msra.mxu0 0.0
  %800 = vmatprep.subr.mxu0 0.0
  %801 = vmatpush2.msra.mxu0 0.0
  %802 = vmatprep.subr.mxu0 0.0
  %803 = vmatpush2.msra.mxu0 0.0
  %804 = vmatprep.subr.mxu0 0.0
  %805 = vmatpush2.msra.mxu0 0.0
  %806 = vmatprep.subr.mxu0 0.0
  %807 = vmatpush2.msra.mxu0 0.0
  %808 = vmatprep.mubr.f32.mxu0 0.0
  %809 = vmatmul.mubr.f32.gmra.mxu0 %v742
  %v810 = vpop.f32.mrf.mxu0
  %v811 = vadd.f32 0.0, %v810
  %v812 = vpop.f32.mrf.mxu0
  %813 = vdwg.mxu0
  %v814 = vadd.f32 %v407, %v811
  %v815 = vmul.f32 %v814, 0.5
  %v816 = vtanh.pop %v815
  %v817 = vmul.f32 %v816, 0.5
  %v818 = vadd.f32 %v817, 0.5
  %v819 = vtanh.pop %v814
  %v820 = vsel %vm438, %v819, %v818
  %v821 = vmul.f32 %v820, %v732
  %823 = vrot.lane.b32.xlu0 %v820, 88
  %v824 = vpop.permute.xlu0 %823
  %v826 = vmul.f32 %v820, %v824
  %828 = vrot.lane.b32.xlu0 %v826, 20
  %v829 = vpop.permute.xlu0 %828
  %v831 = vadd.f32 %v821, %v829
  %v832 = vtanh.pop %v831
  %834 = vrot.lane.b32.xlu0 %v832, 40
  %v835 = vpop.permute.xlu0 %834
  %v837 = vmul.f32 %v820, %v835
  %839 = vrot.lane.b32.xlu0 %v837, 68
  %v840 = vpop.permute.xlu0 %839
  %v841 = vsel %vm439, %v840, 0
  %843 = vmatprep.subr.mxu0 0.0
  %844 = vmatpush1.msra.mxu0 0.0
  %845 = vmatprep.subr.mxu0 0.0
  %846 = vmatpush1.msra.mxu0 0.0
  %847 = vmatprep.subr.mxu0 0.0
  %848 = vmatpush1.msra.mxu0 0.0
  %849 = vmatprep.subr.mxu0 0.0
  %850 = vmatpush1.msra.mxu0 0.0
  %851 = vmatprep.subr.mxu0 0.0
  %852 = vmatpush1.msra.mxu0 0.0
  %853 = vmatprep.subr.mxu0 0.0
  %854 = vmatpush1.msra.mxu0 0.0
  %855 = vmatprep.subr.mxu0 0.0
  %856 = vmatpush1.msra.mxu0 0.0
  %857 = vmatprep.subr.mxu0 0.0
  %858 = vmatpush1.msra.mxu0 0.0
  %859 = vmatprep.subr.mxu0 0.0
  %860 = vmatpush1.msra.mxu0 0.0
  %861 = vmatprep.subr.mxu0 0.0
  %862 = vmatpush1.msra.mxu0 0.0
  %863 = vmatprep.subr.mxu0 0.0
  %864 = vmatpush1.msra.mxu0 0.0
  %865 = vmatprep.subr.mxu0 0.0
  %866 = vmatpush1.msra.mxu0 0.0
  %867 = vmatprep.subr.mxu0 0.0
  %868 = vmatpush1.msra.mxu0 0.0
  %869 = vmatprep.subr.mxu0 0.0
  %870 = vmatpush1.msra.mxu0 %v445
  %871 = vmatprep.subr.mxu0 0.0
  %872 = vmatpush1.msra.mxu0 %v432
  %873 = vmatprep.subr.mxu0 0.0
  %874 = vmatpush1.msra.mxu0 %v431
  %875 = vmatprep.subr.mxu0 0.0
  %876 = vmatpush2.msra.mxu0 0.0
  %877 = vmatprep.subr.mxu0 0.0
  %878 = vmatpush2.msra.mxu0 0.0
  %879 = vmatprep.subr.mxu0 0.0
  %880 = vmatpush2.msra.mxu0 0.0
  %881 = vmatprep.subr.mxu0 0.0
  %882 = vmatpush2.msra.mxu0 0.0
  %883 = vmatprep.subr.mxu0 0.0
  %884 = vmatpush2.msra.mxu0 0.0
  %885 = vmatprep.subr.mxu0 0.0
  %886 = vmatpush2.msra.mxu0 0.0
  %887 = vmatprep.subr.mxu0 0.0
  %888 = vmatpush2.msra.mxu0 0.0
  %889 = vmatprep.subr.mxu0 0.0
  %890 = vmatpush2.msra.mxu0 0.0
  %891 = vmatprep.subr.mxu0 0.0
  %892 = vmatpush2.msra.mxu0 0.0
  %893 = vmatprep.subr.mxu0 0.0
  %894 = vmatpush2.msra.mxu0 0.0
  %895 = vmatprep.subr.mxu0 0.0
  %896 = vmatpush2.msra.mxu0 0.0
  %897 = vmatprep.subr.mxu0 0.0
  %898 = vmatpush2.msra.mxu0 0.0
  %899 = vmatprep.subr.mxu0 0.0
  %900 = vmatpush2.msra.mxu0 0.0
  %901 = vmatprep.subr.mxu0 0.0
  %902 = vmatpush2.msra.mxu0 0.0
  %903 = vmatprep.subr.mxu0 0.0
  %904 = vmatpush2.msra.mxu0 0.0
  %905 = vmatprep.subr.mxu0 0.0
  %906 = vmatpush2.msra.mxu0 0.0
  %907 = vmatprep.mubr.f32.mxu0 0.0
  %908 = vmatmul.mubr.f32.gmra.mxu0 %v841
  %v909 = vpop.f32.mrf.mxu0
  %v910 = vadd.f32 0.0, %v909
  %v911 = vpop.f32.mrf.mxu0
  %912 = vdwg.mxu0
  %v913 = vadd.f32 %v415, %v910
  %v914 = vmul.f32 %v913, 0.5
  %v915 = vtanh.pop %v914
  %v916 = vmul.f32 %v915, 0.5
  %v917 = vadd.f32 %v916, 0.5
  %v918 = vtanh.pop %v913
  %v919 = vsel %vm438, %v918, %v917
  %v920 = vmul.f32 %v919, %v831
  %922 = vrot.lane.b32.xlu0 %v919, 88
  %v923 = vpop.permute.xlu0 %922
  %v925 = vmul.f32 %v919, %v923
  %927 = vrot.lane.b32.xlu0 %v925, 20
  %v928 = vpop.permute.xlu0 %927
  %v930 = vadd.f32 %v920, %v928
  %v931 = vtanh.pop %v930
  %933 = vrot.lane.b32.xlu0 %v931, 40
  %v934 = vpop.permute.xlu0 %933
  %v936 = vmul.f32 %v919, %v934
  %938 = vrot.lane.b32.xlu0 %v936, 68
  %v939 = vpop.permute.xlu0 %938
  %v940 = vsel %vm439, %v939, 0
  %942 = vmatprep.subr.mxu0 0.0
  %943 = vmatpush1.msra.mxu0 0.0
  %944 = vmatprep.subr.mxu0 0.0
  %945 = vmatpush1.msra.mxu0 0.0
  %946 = vmatprep.subr.mxu0 0.0
  %947 = vmatpush1.msra.mxu0 0.0
  %948 = vmatprep.subr.mxu0 0.0
  %949 = vmatpush1.msra.mxu0 0.0
  %950 = vmatprep.subr.mxu0 0.0
  %951 = vmatpush1.msra.mxu0 0.0
  %952 = vmatprep.subr.mxu0 0.0
  %953 = vmatpush1.msra.mxu0 0.0
  %954 = vmatprep.subr.mxu0 0.0
  %955 = vmatpush1.msra.mxu0 0.0
  %956 = vmatprep.subr.mxu0 0.0
  %957 = vmatpush1.msra.mxu0 0.0
  %958 = vmatprep.subr.mxu0 0.0
  %959 = vmatpush1.msra.mxu0 0.0
  %960 = vmatprep.subr.mxu0 0.0
  %961 = vmatpush1.msra.mxu0 0.0
  %962 = vmatprep.subr.mxu0 0.0
  %963 = vmatpush1.msra.mxu0 0.0
  %964 = vmatprep.subr.mxu0 0.0
  %965 = vmatpush1.msra.mxu0 0.0
  %966 = vmatprep.subr.mxu0 0.0
  %967 = vmatpush1.msra.mxu0 0.0
  %968 = vmatprep.subr.mxu0 0.0
  %969 = vmatpush1.msra.mxu0 %v445
  %970 = vmatprep.subr.mxu0 0.0
  %971 = vmatpush1.msra.mxu0 %v432
  %972 = vmatprep.subr.mxu0 0.0
  %973 = vmatpush1.msra.mxu0 %v431
  %974 = vmatprep.subr.mxu0 0.0
  %975 = vmatpush2.msra.mxu0 0.0
  %976 = vmatprep.subr.mxu0 0.0
  %977 = vmatpush2.msra.mxu0 0.0
  %978 = vmatprep.subr.mxu0 0.0
  %979 = vmatpush2.msra.mxu0 0.0
  %980 = vmatprep.subr.mxu0 0.0
  %981 = vmatpush2.msra.mxu0 0.0
  %982 = vmatprep.subr.mxu0 0.0
  %983 = vmatpush2.msra.mxu0 0.0
  %984 = vmatprep.subr.mxu0 0.0
  %985 = vmatpush2.msra.mxu0 0.0
  %986 = vmatprep.subr.mxu0 0.0
  %987 = vmatpush2.msra.mxu0 0.0
  %988 = vmatprep.subr.mxu0 0.0
  %989 = vmatpush2.msra.mxu0 0.0
  %990 = vmatprep.subr.mxu0 0.0
  %991 = vmatpush2.msra.mxu0 0.0
  %992 = vmatprep.subr.mxu0 0.0
  %993 = vmatpush2.msra.mxu0 0.0
  %994 = vmatprep.subr.mxu0 0.0
  %995 = vmatpush2.msra.mxu0 0.0
  %996 = vmatprep.subr.mxu0 0.0
  %997 = vmatpush2.msra.mxu0 0.0
  %998 = vmatprep.subr.mxu0 0.0
  %999 = vmatpush2.msra.mxu0 0.0
  %1000 = vmatprep.subr.mxu0 0.0
  %1001 = vmatpush2.msra.mxu0 0.0
  %1002 = vmatprep.subr.mxu0 0.0
  %1003 = vmatpush2.msra.mxu0 0.0
  %1004 = vmatprep.subr.mxu0 0.0
  %1005 = vmatpush2.msra.mxu0 0.0
  %1006 = vmatprep.mubr.f32.mxu0 0.0
  %1007 = vmatmul.mubr.f32.gmra.mxu0 %v940
  %v1008 = vpop.f32.mrf.mxu0
  %v1009 = vadd.f32 0.0, %v1008
  %v1010 = vpop.f32.mrf.mxu0
  %1011 = vdwg.mxu0
  %v1012 = vadd.f32 %v423, %v1009
  %v1013 = vmul.f32 %v1012, 0.5
  %v1014 = vtanh.pop %v1013
  %v1015 = vmul.f32 %v1014, 0.5
  %v1016 = vadd.f32 %v1015, 0.5
  %v1017 = vtanh.pop %v1012
  %v1018 = vsel %vm438, %v1017, %v1016
  %v1019 = vmul.f32 %v1018, %v930
  %1021 = vrot.lane.b32.xlu0 %v1018, 88
  %v1022 = vpop.permute.xlu0 %1021
  %v1024 = vmul.f32 %v1018, %v1022
  %1026 = vrot.lane.b32.xlu0 %v1024, 20
  %v1027 = vpop.permute.xlu0 %1026
  %v1029 = vadd.f32 %v1019, %v1027
  %v1030 = vtanh.pop %v1029
  %1032 = vrot.lane.b32.xlu0 %v1030, 40
  %v1033 = vpop.permute.xlu0 %1032
  %v1035 = vmul.f32 %v1018, %v1033
  %1037 = vrot.lane.b32.xlu0 %v1035, 68
  %v1038 = vpop.permute.xlu0 %1037
  %v1039 = vsel %vm439, %v1038, 0
  %1041 = vmatprep.subr.mxu0 0.0
  %1042 = vmatpush1.msra.mxu0 0.0
  %1043 = vmatprep.subr.mxu0 0.0
  %1044 = vmatpush1.msra.mxu0 0.0
  %1045 = vmatprep.subr.mxu0 0.0
  %1046 = vmatpush1.msra.mxu0 0.0
  %1047 = vmatprep.subr.mxu0 0.0
  %1048 = vmatpush1.msra.mxu0 0.0
  %1049 = vmatprep.subr.mxu0 0.0
  %1050 = vmatpush1.msra.mxu0 0.0
  %1051 = vmatprep.subr.mxu0 0.0
  %1052 = vmatpush1.msra.mxu0 0.0
  %1053 = vmatprep.subr.mxu0 0.0
  %1054 = vmatpush1.msra.mxu0 0.0
  %1055 = vmatprep.subr.mxu0 0.0
  %1056 = vmatpush1.msra.mxu0 0.0
  %1057 = vmatprep.subr.mxu0 0.0
  %1058 = vmatpush1.msra.mxu0 0.0
  %1059 = vmatprep.subr.mxu0 0.0
  %1060 = vmatpush1.msra.mxu0 0.0
  %1061 = vmatprep.subr.mxu0 0.0
  %1062 = vmatpush1.msra.mxu0 0.0
  %1063 = vmatprep.subr.mxu0 0.0
  %1064 = vmatpush1.msra.mxu0 0.0
  %1065 = vmatprep.subr.mxu0 0.0
  %1066 = vmatpush1.msra.mxu0 0.0
  %1067 = vmatprep.subr.mxu0 0.0
  %1068 = vmatpush1.msra.mxu0 %v445
  %1069 = vmatprep.subr.mxu0 0.0
  %1070 = vmatpush1.msra.mxu0 %v432
  %1071 = vmatprep.subr.mxu0 0.0
  %1072 = vmatpush1.msra.mxu0 %v431
  %1073 = vmatprep.subr.mxu0 0.0
  %1074 = vmatpush2.msra.mxu0 0.0
  %1075 = vmatprep.subr.mxu0 0.0
  %1076 = vmatpush2.msra.mxu0 0.0
  %1077 = vmatprep.subr.mxu0 0.0
  %1078 = vmatpush2.msra.mxu0 0.0
  %1079 = vmatprep.subr.mxu0 0.0
  %1080 = vmatpush2.msra.mxu0 0.0
  %1081 = vmatprep.subr.mxu0 0.0
  %1082 = vmatpush2.msra.mxu0 0.0
  %1083 = vmatprep.subr.mxu0 0.0
  %1084 = vmatpush2.msra.mxu0 0.0
  %1085 = vmatprep.subr.mxu0 0.0
  %1086 = vmatpush2.msra.mxu0 0.0
  %1087 = vmatprep.subr.mxu0 0.0
  %1088 = vmatpush2.msra.mxu0 0.0
  %1089 = vmatprep.subr.mxu0 0.0
  %1090 = vmatpush2.msra.mxu0 0.0
  %1091 = vmatprep.subr.mxu0 0.0
  %1092 = vmatpush2.msra.mxu0 0.0
  %1093 = vmatprep.subr.mxu0 0.0
  %1094 = vmatpush2.msra.mxu0 0.0
  %1095 = vmatprep.subr.mxu0 0.0
  %1096 = vmatpush2.msra.mxu0 0.0
  %1097 = vmatprep.subr.mxu0 0.0
  %1098 = vmatpush2.msra.mxu0 0.0
  %1099 = vmatprep.subr.mxu0 0.0
  %1100 = vmatpush2.msra.mxu0 0.0
  %1101 = vmatprep.subr.mxu0 0.0
  %1102 = vmatpush2.msra.mxu0 0.0
  %1103 = vmatprep.subr.mxu0 0.0
  %1104 = vmatpush2.msra.mxu0 0.0
  %1105 = vmatprep.mubr.f32.mxu0 0.0
  %1106 = vmatmul.mubr.f32.gmra.mxu0 %v1039
  %v1107 = vpop.f32.mrf.mxu0
  %v1108 = vadd.f32 0.0, %v1107
  %v1109 = vpop.f32.mrf.mxu0
  %1110 = vdwg.mxu0
  %v1111 = vadd.f32 %v422, %v1108
  %v1112 = vmul.f32 %v1111, 0.5
  %v1113 = vtanh.pop %v1112
  %v1114 = vmul.f32 %v1113, 0.5
  %v1115 = vadd.f32 %v1114, 0.5
  %v1116 = vtanh.pop %v1111
  %v1117 = vsel %vm438, %v1116, %v1115
  %v1118 = vmul.f32 %v1117, %v1029
  %1120 = vrot.lane.b32.xlu0 %v1117, 88
  %v1121 = vpop.permute.xlu0 %1120
  %v1123 = vmul.f32 %v1117, %v1121
  %1125 = vrot.lane.b32.xlu0 %v1123, 20
  %v1126 = vpop.permute.xlu0 %1125
  %v1128 = vadd.f32 %v1118, %v1126
  %v1129 = vtanh.pop %v1128
  %1131 = vrot.lane.b32.xlu0 %v1129, 40
  %v1132 = vpop.permute.xlu0 %1131
  %v1134 = vmul.f32 %v1117, %v1132
  %v1136 = vcombine.high %v290, %v290
  %v1138 = vunpack.c.l.s4 1983009808
  %v1139 = vunpack.c.0.s8 %v1138
  %v1140 = vlaneseq
  %v1141 = vshrl.u32 %v1140, 7
  %v1142 = vsub.s32 %v1139, %v1141
  %v1143 = vrot.slane %v1136, %v1142
  %v1144 = vcombine.high %v1143, %v1143
  %v1146 = vld [vmem:[%s8] sm:$0xff]
  %v1147 = vld [vmem:[%s8 + $0x8] sm:$0xff]
  %v1148 = vld [vmem:[%s8 + $0x10] sm:$0xff]
  %v1149 = vld [vmem:[%s8 + $0x18] sm:$0xff]
  %v1150 = vld [vmem:[%s8 + $0x20] sm:$0xff]
  %v1151 = vld [vmem:[%s8 + $0x28] sm:$0xff]
  %v1152 = vld [vmem:[%s8 + $0x30] sm:$0xff]
  %v1153 = vld [vmem:[%s8 + $0x38] sm:$0xff]
  %v1154 = vld [vmem:[%s8 + $0x40] sm:$0xff]
  %v1155 = vld [vmem:[%s8 + $0x48] sm:$0xff]
  %v1156 = vld [vmem:[%s8 + $0x50] sm:$0xff]
  %v1157 = vld [vmem:[%s8 + $0x58] sm:$0xff]
  %v1158 = vld [vmem:[%s8 + $0x60] sm:$0xff]
  %v1159 = vld [vmem:[%s8 + $0x68] sm:$0xff]
  %v1160 = vld [vmem:[%s8 + $0x70] sm:$0xff]
  %v1161 = vld [vmem:[%s8 + $0x78] sm:$0xff]
  %v1162 = vld [vmem:[%s9] sm:$0xff]
  %v1163 = vld [vmem:[%s9 + $0x8] sm:$0xff]
  %v1164 = vld [vmem:[%s9 + $0x10] sm:$0xf]
  %1166 = vrot.lane.b32.xlu0 %v1134, 68
  %v1167 = vpop.permute.xlu0 %1166
  %v1168 = vsel %vm439, %v1167, 0
  %v1171 = vsel %vm443, %v1164, 0
  %1173 = vmatprep.subr.mxu0 0.0
  %1174 = vmatpush1.msra.mxu0 0.0
  %1175 = vmatprep.subr.mxu0 0.0
  %1176 = vmatpush1.msra.mxu0 0.0
  %1177 = vmatprep.subr.mxu0 0.0
  %1178 = vmatpush1.msra.mxu0 0.0
  %1179 = vmatprep.subr.mxu0 0.0
  %1180 = vmatpush1.msra.mxu0 0.0
  %1181 = vmatprep.subr.mxu0 0.0
  %1182 = vmatpush1.msra.mxu0 0.0
  %1183 = vmatprep.subr.mxu0 0.0
  %1184 = vmatpush1.msra.mxu0 0.0
  %1185 = vmatprep.subr.mxu0 0.0
  %1186 = vmatpush1.msra.mxu0 0.0
  %1187 = vmatprep.subr.mxu0 0.0
  %1188 = vmatpush1.msra.mxu0 0.0
  %1189 = vmatprep.subr.mxu0 0.0
  %1190 = vmatpush1.msra.mxu0 0.0
  %1191 = vmatprep.subr.mxu0 0.0
  %1192 = vmatpush1.msra.mxu0 0.0
  %1193 = vmatprep.subr.mxu0 0.0
  %1194 = vmatpush1.msra.mxu0 0.0
  %1195 = vmatprep.subr.mxu0 0.0
  %1196 = vmatpush1.msra.mxu0 0.0
  %1197 = vmatprep.subr.mxu0 0.0
  %1198 = vmatpush1.msra.mxu0 0.0
  %1199 = vmatprep.subr.mxu0 0.0
  %1200 = vmatpush1.msra.mxu0 %v1171
  %1201 = vmatprep.subr.mxu0 0.0
  %1202 = vmatpush1.msra.mxu0 %v1163
  %1203 = vmatprep.subr.mxu0 0.0
  %1204 = vmatpush1.msra.mxu0 %v1162
  %1205 = vmatprep.subr.mxu0 0.0
  %1206 = vmatpush2.msra.mxu0 0.0
  %1207 = vmatprep.subr.mxu0 0.0
  %1208 = vmatpush2.msra.mxu0 0.0
  %1209 = vmatprep.subr.mxu0 0.0
  %1210 = vmatpush2.msra.mxu0 0.0
  %1211 = vmatprep.subr.mxu0 0.0
  %1212 = vmatpush2.msra.mxu0 0.0
  %1213 = vmatprep.subr.mxu0 0.0
  %1214 = vmatpush2.msra.mxu0 0.0
  %1215 = vmatprep.subr.mxu0 0.0
  %1216 = vmatpush2.msra.mxu0 0.0
  %1217 = vmatprep.subr.mxu0 0.0
  %1218 = vmatpush2.msra.mxu0 0.0
  %1219 = vmatprep.subr.mxu0 0.0
  %1220 = vmatpush2.msra.mxu0 0.0
  %1221 = vmatprep.subr.mxu0 0.0
  %1222 = vmatpush2.msra.mxu0 0.0
  %1223 = vmatprep.subr.mxu0 0.0
  %1224 = vmatpush2.msra.mxu0 0.0
  %1225 = vmatprep.subr.mxu0 0.0
  %1226 = vmatpush2.msra.mxu0 0.0
  %1227 = vmatprep.subr.mxu0 0.0
  %1228 = vmatpush2.msra.mxu0 0.0
  %1229 = vmatprep.subr.mxu0 0.0
  %1230 = vmatpush2.msra.mxu0 0.0
  %1231 = vmatprep.subr.mxu0 0.0
  %1232 = vmatpush2.msra.mxu0 0.0
  %1233 = vmatprep.subr.mxu0 0.0
  %1234 = vmatpush2.msra.mxu0 0.0
  %1235 = vmatprep.subr.mxu0 0.0
  %1236 = vmatpush2.msra.mxu0 0.0
  %1237 = vmatprep.mubr.f32.mxu0 0.0
  %1238 = vmatmul.mubr.f32.gmra.mxu0 %v1168
  %v1239 = vpop.f32.mrf.mxu0
  %v1240 = vadd.f32 0.0, %v1239
  %v1241 = vpop.f32.mrf.mxu0
  %1242 = vdwg.mxu0
  %1243 = vmatprep.subr.mxu0 0.0
  %1244 = vmatpush1.msra.mxu0 %v1161
  %1245 = vmatprep.subr.mxu0 0.0
  %1246 = vmatpush1.msra.mxu0 %v1160
  %1247 = vmatprep.subr.mxu0 0.0
  %1248 = vmatpush1.msra.mxu0 %v1159
  %1249 = vmatprep.subr.mxu0 0.0
  %1250 = vmatpush1.msra.mxu0 %v1158
  %1251 = vmatprep.subr.mxu0 0.0
  %1252 = vmatpush1.msra.mxu0 %v1157
  %1253 = vmatprep.subr.mxu0 0.0
  %1254 = vmatpush1.msra.mxu0 %v1156
  %1255 = vmatprep.subr.mxu0 0.0
  %1256 = vmatpush1.msra.mxu0 %v1155
  %1257 = vmatprep.subr.mxu0 0.0
  %1258 = vmatpush1.msra.mxu0 %v1154
  %1259 = vmatprep.subr.mxu0 0.0
  %1260 = vmatpush1.msra.mxu0 %v1153
  %1261 = vmatprep.subr.mxu0 0.0
  %1262 = vmatpush1.msra.mxu0 %v1152
  %1263 = vmatprep.subr.mxu0 0.0
  %1264 = vmatpush1.msra.mxu0 %v1151
  %1265 = vmatprep.subr.mxu0 0.0
  %1266 = vmatpush1.msra.mxu0 %v1150
  %1267 = vmatprep.subr.mxu0 0.0
  %1268 = vmatpush1.msra.mxu0 %v1149
  %1269 = vmatprep.subr.mxu0 0.0
  %1270 = vmatpush1.msra.mxu0 %v1148
  %1271 = vmatprep.subr.mxu0 0.0
  %1272 = vmatpush1.msra.mxu0 %v1147
  %1273 = vmatprep.subr.mxu0 0.0
  %1274 = vmatpush1.msra.mxu0 %v1146
  %1275 = vmatprep.subr.mxu0 0.0
  %1276 = vmatpush2.msra.mxu0 0.0
  %1277 = vmatprep.subr.mxu0 0.0
  %1278 = vmatpush2.msra.mxu0 0.0
  %1279 = vmatprep.subr.mxu0 0.0
  %1280 = vmatpush2.msra.mxu0 0.0
  %1281 = vmatprep.subr.mxu0 0.0
  %1282 = vmatpush2.msra.mxu0 0.0
  %1283 = vmatprep.subr.mxu0 0.0
  %1284 = vmatpush2.msra.mxu0 0.0
  %1285 = vmatprep.subr.mxu0 0.0
  %1286 = vmatpush2.msra.mxu0 0.0
  %1287 = vmatprep.subr.mxu0 0.0
  %1288 = vmatpush2.msra.mxu0 0.0
  %1289 = vmatprep.subr.mxu0 0.0
  %1290 = vmatpush2.msra.mxu0 0.0
  %1291 = vmatprep.subr.mxu0 0.0
  %1292 = vmatpush2.msra.mxu0 0.0
  %1293 = vmatprep.subr.mxu0 0.0
  %1294 = vmatpush2.msra.mxu0 0.0
  %1295 = vmatprep.subr.mxu0 0.0
  %1296 = vmatpush2.msra.mxu0 0.0
  %1297 = vmatprep.subr.mxu0 0.0
  %1298 = vmatpush2.msra.mxu0 0.0
  %1299 = vmatprep.subr.mxu0 0.0
  %1300 = vmatpush2.msra.mxu0 0.0
  %1301 = vmatprep.subr.mxu0 0.0
  %1302 = vmatpush2.msra.mxu0 0.0
  %1303 = vmatprep.subr.mxu0 0.0
  %1304 = vmatpush2.msra.mxu0 0.0
  %1305 = vmatprep.subr.mxu0 0.0
  %1306 = vmatpush2.msra.mxu0 0.0
  %1307 = vmatprep.mubr.f32.mxu0 0.0
  %1308 = vmatmul.mubr.f32.gmra.mxu0 %v1144
  %v1309 = vpop.f32.mrf.mxu0
  %v1310 = vadd.f32 %v1240, %v1309
  %v1311 = vpop.f32.mrf.mxu0
  %1312 = vdwg.mxu0
  %v1313 = vld [vmem:[#allocation2] sm:$0x1]
  %v1315 = vlaneseq
  %v1316 = vshrl.u32 %v1315, 7
  %v1317 = vsub.s32 0, %v1316
  %v1318 = vrot.slane %v1313, %v1317
  %v1320 = vadd.f32 %v1310, %v1318
  %vm1321 = vcmask 1024
  %1322 = vst.msk [vmem:[%s11] sm:$0x3] %vm1321, %v1320
  // Predicated region
  $region46: #{lstm_forward.1} parent=0 // pred_check
    _
  $region47: #{lstm_forward.1} parent=0 // pred_check_branch
    %1324 = sbr.rel (0) target = $region49
  $region48: #{lstm_forward.1} parent=0 // pred_region
    _
  $region49: #{lstm_forward.1} parent=0 // pred_fallthru
    _
  // Predicated region
  $region50: #{lstm_forward.1} parent=0 // pred_check
    _
  $region51: #{lstm_forward.1} parent=0 // pred_check_branch
    %1326 = sbr.rel (0) target = $region53
  $region52: #{lstm_forward.1} parent=0 // pred_region
    _
  $region53: #{lstm_forward.1} parent=0 // pred_fallthru
    _

</llo_original>
